<compile_context>
chip_gen: v7x
topology: tpu7x:2x2x1
jax: 0.10.0
libtpu: 0.0.40
codegen_flags: <defaults>
</compile_context>

<pallas_src>
import math

import jax
import jax.numpy as jnp
from jax.experimental import pallas as pl
from jax.experimental.pallas import tpu as pltpu

NUM_COMPLETE_POINT_CLOUD = 2048
IN_FEATURES = 3 * NUM_COMPLETE_POINT_CLOUD        # 6144
H1, H2, OUT = 512, 256, 1


# ------------------------------- Pallas kernel ------------------------------

def _disc_kernel(x_ref, w1_ref, b1_ref, w2_ref, b2_ref, w3_ref, b3_ref,
                 o_ref, acc_ref):
    """Fused 3-layer MLP.  Grid = (row tiles i, K tiles k of the 1st matmul)."""
    k = pl.program_id(1)

    @pl.when(k == 0)
    def _init():
        acc_ref[...] = jnp.zeros_like(acc_ref)

    # Layer 1 partial product: acc += x_tile @ w1_tile   (f32 accumulation).
    acc_ref[...] += jnp.dot(x_ref[...], w1_ref[...],
                            preferred_element_type=jnp.float32)

    @pl.when(k == pl.num_programs(1) - 1)
    def _epilogue():
        h1 = jnp.maximum(acc_ref[...] + b1_ref[...].astype(jnp.float32), 0.0)
        h2 = jnp.dot(h1.astype(w2_ref.dtype), w2_ref[...],
                     preferred_element_type=jnp.float32)
        h2 = jnp.maximum(h2 + b2_ref[...].astype(jnp.float32), 0.0)
        h3 = jnp.dot(h2.astype(w3_ref.dtype), w3_ref[...],
                     preferred_element_type=jnp.float32)
        h3 = h3 + b3_ref[...].astype(jnp.float32)
        o_ref[...] = (1.0 / (1.0 + jnp.exp(-h3))).astype(o_ref.dtype)   # Sigmoid


# ------------------------------ kernel wrapper -------------------------------

def discriminator_forward(params, x, *, tm_pref=512, tk=1024):
    """x: (..., 2048, 3) or (B, 6144).  Returns (B, 1) in x.dtype."""
    x2 = x.reshape(-1, IN_FEATURES)
    M, K = x2.shape
    if K % tk != 0:
        tk = K

    # Row tiling: full block for small batches, else pad to a multiple of
    # tm_pref so every block is sublane-aligned and W1 reloads are amortized.
    if M <= tm_pref:
        tm, Mp = M, M
    else:
        tm = tm_pref
        Mp = ((M + tm - 1) // tm) * tm
        if Mp != M:
            x2 = jnp.pad(x2, ((0, Mp - M), (0, 0)))

    grid = (Mp // tm, K // tk)

    w1, b1 = params["w1"], params["b1"]
    w2, b2 = params["w2"], params["b2"]
    w3, b3 = params["w3"], params["b3"]

    itemsize = jnp.dtype(x2.dtype).itemsize
    n_row_tiles = grid[0]
    cost = pl.CostEstimate(
        flops=2 * Mp * (IN_FEATURES * H1 + H1 * H2 + H2 * OUT),
        transcendentals=Mp,
        bytes_accessed=itemsize * (Mp * IN_FEATURES
                                   + n_row_tiles * IN_FEATURES * H1
                                   + H1 * H2 + H2 * OUT
                                   + H1 + H2 + OUT
                                   + Mp * OUT),
    )

    out = pl.pallas_call(
        _disc_kernel,
        out_shape=jax.ShapeDtypeStruct((Mp, OUT), x2.dtype),
        grid_spec=pltpu.PrefetchScalarGridSpec(
            num_scalar_prefetch=0,
            grid=grid,
            in_specs=[
                pl.BlockSpec((tm, tk), lambda i, k: (i, k)),    # x row/K tile
                pl.BlockSpec((tk, H1), lambda i, k: (k, 0)),    # W1 K tile
                pl.BlockSpec((1, H1), lambda i, k: (0, 0)),     # b1 (resident)
                pl.BlockSpec((H1, H2), lambda i, k: (0, 0)),    # W2 (resident)
                pl.BlockSpec((1, H2), lambda i, k: (0, 0)),     # b2 (resident)
                pl.BlockSpec((H2, OUT), lambda i, k: (0, 0)),   # W3 (resident)
                pl.BlockSpec((1, OUT), lambda i, k: (0, 0)),    # b3 (resident)
            ],
            out_specs=pl.BlockSpec((tm, OUT), lambda i, k: (i, 0)),
            scratch_shapes=[pltpu.VMEM((tm, H1), jnp.float32)],
        ),
        compiler_params=pltpu.CompilerParams(
            dimension_semantics=("parallel", "arbitrary"),
            vmem_limit_bytes=32 * 1024 * 1024),
        cost_estimate=cost,
    )(x2, w1, b1, w2, b2, w3, b3)

    return out[:M] if Mp != M else out


# --------------------------- reference / params ------------------------------

def discriminator_reference(params, x):
    hp = jax.lax.Precision.HIGHEST
    x2 = x.reshape(-1, IN_FEATURES)
    h = jnp.maximum(jnp.dot(x2, params["w1"], precision=hp) + params["b1"], 0.0)
    h = jnp.maximum(jnp.dot(h, params["w2"], precision=hp) + params["b2"], 0.0)
    h = jnp.dot(h, params["w3"], precision=hp) + params["b3"]
    return 1.0 / (1.0 + jnp.exp(-h))


def init_params(key, dtype=jnp.float32):
    # PyTorch nn.Linear default init: U(-1/sqrt(fan_in), 1/sqrt(fan_in)).
    def lin(k, din, dout):
        kw, kb = jax.random.split(k)
        bound = 1.0 / math.sqrt(din)
        w = jax.random.uniform(kw, (din, dout), dtype, -bound, bound)
        b = jax.random.uniform(kb, (1, dout), dtype, -bound, bound)
        return w, b

    k1, k2, k3 = jax.random.split(key, 3)
    w1, b1 = lin(k1, IN_FEATURES, H1)
    w2, b2 = lin(k2, H1, H2)
    w3, b3 = lin(k3, H2, OUT)
    return dict(w1=w1, b1=b1, w2=w2, b2=b2, w3=w3, b3=b3)


# ----------------------------------- driver ----------------------------------

if __name__ == "__main__":
    B = 4
    root = jax.random.PRNGKey(0)
    kx, kp = jax.random.split(root)
    x = jax.random.normal(kx, (B, NUM_COMPLETE_POINT_CLOUD, 3), jnp.float32)
    params = init_params(kp)

    out = discriminator_forward(params, x)
    out = jax.block_until_ready(out)

    ref = discriminator_reference(params, x)
    assert out.shape == (B, 1), out.shape
    assert bool(jnp.all(jnp.isfinite(out)))
    assert bool(jnp.all((out > 0.0) & (out < 1.0)))
    assert bool(jnp.allclose(out, ref, rtol=1e-3, atol=1e-3)), (
        f"max abs err {float(jnp.max(jnp.abs(out - ref)))}")
    print("KERNEL_OK")
</pallas_src>

<mosaic_0001>
module attributes {stable_mosaic.version = 11 : i64} {
  func.func @_disc_kernel(%arg0: i32, %arg1: i32, %arg2: memref<4x1024xf32, #tpu.memory_space<vmem>>, %arg3: memref<1024x512xf32, #tpu.memory_space<vmem>>, %arg4: memref<1x512xf32, #tpu.memory_space<vmem>>, %arg5: memref<512x256xf32, #tpu.memory_space<vmem>>, %arg6: memref<1x256xf32, #tpu.memory_space<vmem>>, %arg7: memref<256x1xf32, #tpu.memory_space<vmem>>, %arg8: memref<1x1xf32, #tpu.memory_space<vmem>>, %arg9: memref<4x1xf32, #tpu.memory_space<vmem>>, %arg10: memref<4x512xf32, #tpu.memory_space<vmem>>) attributes {dimension_semantics = [#tpu.dimension_semantics<parallel>, #tpu.dimension_semantics<arbitrary>], iteration_bounds = array<i64: 1, 6>, scalar_prefetch = 0 : i64, scratch_operands = 1 : i64, tpu.core_type = #tpu.core_type<tc>, window_params = [{transform_indices = @transform_0, window_bounds = array<i64: 4, 1024>}, {transform_indices = @transform_1, window_bounds = array<i64: 1024, 512>}, {pipeline_mode = #tpu.pipeline_mode<synchronous>, transform_indices = @transform_2, window_bounds = array<i64: 1, 512>}, {pipeline_mode = #tpu.pipeline_mode<synchronous>, transform_indices = @transform_3, window_bounds = array<i64: 512, 256>}, {pipeline_mode = #tpu.pipeline_mode<synchronous>, transform_indices = @transform_4, window_bounds = array<i64: 1, 256>}, {pipeline_mode = #tpu.pipeline_mode<synchronous>, transform_indices = @transform_5, window_bounds = array<i64: 256, 1>}, {pipeline_mode = #tpu.pipeline_mode<synchronous>, transform_indices = @transform_6, window_bounds = array<i64: 1, 1>}, {transform_indices = @transform_7, window_bounds = array<i64: 4, 1>}]} {
    %c0_i32 = arith.constant 0 : i32
    %0 = arith.cmpi eq, %arg1, %c0_i32 : i32
    %1 = arith.extui %0 : i1 to i32
    %c0_i32_0 = arith.constant 0 : i32
    %2 = arith.cmpi ne, %1, %c0_i32_0 : i32
    scf.if %2 {
      %cst_9 = arith.constant 0.000000e+00 : f32
      %12 = vector.broadcast %cst_9 : f32 to vector<4x512xf32>
      %c0_10 = arith.constant 0 : index
      %c0_11 = arith.constant 0 : index
      %13 = vector.load %arg10[%c0_10, %c0_11] : memref<4x512xf32, #tpu.memory_space<vmem>>, vector<4x512xf32>
      tpu.vector_store %arg10[%c0_10, %c0_11], %12 {strides = array<i32>} : memref<4x512xf32, #tpu.memory_space<vmem>>, vector<4x512xf32>,
    } else {
    }
    %c0 = arith.constant 0 : index
    %c0_1 = arith.constant 0 : index
    %3 = vector.load %arg10[%c0, %c0_1] : memref<4x512xf32, #tpu.memory_space<vmem>>, vector<4x512xf32>
    %c0_2 = arith.constant 0 : index
    %c0_3 = arith.constant 0 : index
    %4 = vector.load %arg2[%c0_2, %c0_3] : memref<4x1024xf32, #tpu.memory_space<vmem>>, vector<4x1024xf32>
    %c0_4 = arith.constant 0 : index
    %c0_5 = arith.constant 0 : index
    %5 = vector.load %arg3[%c0_4, %c0_5] : memref<1024x512xf32, #tpu.memory_space<vmem>>, vector<1024x512xf32>
    %cst = arith.constant dense<0.000000e+00> : vector<4x512xf32>
    %6 = tpu.matmul %4, %5, %cst {dimension_numbers = #tpu.dot_dimension_numbers<[1], [0], [0], [1], [0, 0, 1, 1], [], []>} : vector<4x1024xf32>, vector<1024x512xf32>, vector<4x512xf32> -> vector<4x512xf32>
    %7 = arith.addf %3, %6 : vector<4x512xf32>
    %c0_6 = arith.constant 0 : index
    %c0_7 = arith.constant 0 : index
    %8 = vector.load %arg10[%c0_6, %c0_7] : memref<4x512xf32, #tpu.memory_space<vmem>>, vector<4x512xf32>
    tpu.vector_store %arg10[%c0_6, %c0_7], %7 {strides = array<i32>} : memref<4x512xf32, #tpu.memory_space<vmem>>, vector<4x512xf32>,
    %c5_i32 = arith.constant 5 : i32
    %9 = arith.cmpi eq, %arg1, %c5_i32 : i32
    %10 = arith.extui %9 : i1 to i32
    %c0_i32_8 = arith.constant 0 : i32
    %11 = arith.cmpi ne, %10, %c0_i32_8 : i32
    scf.if %11 {
      %c0_9 = arith.constant 0 : index
      %c0_10 = arith.constant 0 : index
      %12 = vector.load %arg10[%c0_9, %c0_10] : memref<4x512xf32, #tpu.memory_space<vmem>>, vector<4x512xf32>
      %c0_11 = arith.constant 0 : index
      %c0_12 = arith.constant 0 : index
      %13 = vector.load %arg4[%c0_11, %c0_12] : memref<1x512xf32, #tpu.memory_space<vmem>>, vector<1x512xf32>
      %14 = vector.broadcast %13 : vector<1x512xf32> to vector<4x512xf32>
      %15 = arith.addf %12, %14 : vector<4x512xf32>
      %cst_13 = arith.constant 0.000000e+00 : f32
      %16 = vector.broadcast %cst_13 : f32 to vector<4x512xf32>
      %17 = arith.maximumf %15, %16 : vector<4x512xf32>
      %c0_14 = arith.constant 0 : index
      %c0_15 = arith.constant 0 : index
      %18 = vector.load %arg5[%c0_14, %c0_15] : memref<512x256xf32, #tpu.memory_space<vmem>>, vector<512x256xf32>
      %cst_16 = arith.constant dense<0.000000e+00> : vector<4x256xf32>
      %19 = tpu.matmul %17, %18, %cst_16 {dimension_numbers = #tpu.dot_dimension_numbers<[1], [0], [0], [1], [0, 0, 1, 1], [], []>} : vector<4x512xf32>, vector<512x256xf32>, vector<4x256xf32> -> vector<4x256xf32>
      %c0_17 = arith.constant 0 : index
      %c0_18 = arith.constant 0 : index
      %20 = vector.load %arg6[%c0_17, %c0_18] : memref<1x256xf32, #tpu.memory_space<vmem>>, vector<1x256xf32>
      %21 = vector.broadcast %20 : vector<1x256xf32> to vector<4x256xf32>
      %22 = arith.addf %19, %21 : vector<4x256xf32>
      %cst_19 = arith.constant 0.000000e+00 : f32
      %23 = vector.broadcast %cst_19 : f32 to vector<4x256xf32>
      %24 = arith.maximumf %22, %23 : vector<4x256xf32>
      %c0_20 = arith.constant 0 : index
      %c0_21 = arith.constant 0 : index
      %25 = vector.load %arg7[%c0_20, %c0_21] : memref<256x1xf32, #tpu.memory_space<vmem>>, vector<256x1xf32>
      %cst_22 = arith.constant dense<0.000000e+00> : vector<4x1xf32>
      %26 = tpu.matmul %24, %25, %cst_22 {dimension_numbers = #tpu.dot_dimension_numbers<[1], [0], [0], [1], [0, 0, 1, 1], [], []>} : vector<4x256xf32>, vector<256x1xf32>, vector<4x1xf32> -> vector<4x1xf32>
      %c0_23 = arith.constant 0 : index
      %c0_24 = arith.constant 0 : index
      %27 = vector.load %arg8[%c0_23, %c0_24] : memref<1x1xf32, #tpu.memory_space<vmem>>, vector<1x1xf32>
      %28 = vector.broadcast %27 : vector<1x1xf32> to vector<4x1xf32>
      %29 = arith.addf %26, %28 : vector<4x1xf32>
      %cst_25 = arith.constant 0.000000e+00 : f32
      %30 = vector.broadcast %cst_25 : f32 to vector<4x1xf32>
      %31 = arith.subf %30, %29 : vector<4x1xf32>
      %32 = math.exp %31 : vector<4x1xf32>
      %cst_26 = arith.constant 1.000000e+00 : f32
      %33 = vector.broadcast %cst_26 : f32 to vector<4x1xf32>
      %34 = arith.addf %33, %32 : vector<4x1xf32>
      %cst_27 = arith.constant 1.000000e+00 : f32
      %35 = vector.broadcast %cst_27 : f32 to vector<4x1xf32>
      %36 = arith.divf %35, %34 : vector<4x1xf32>
      %c0_28 = arith.constant 0 : index
      %c0_29 = arith.constant 0 : index
      %37 = vector.load %arg9[%c0_28, %c0_29] : memref<4x1xf32, #tpu.memory_space<vmem>>, vector<4x1xf32>
      tpu.vector_store %arg9[%c0_28, %c0_29], %36 {strides = array<i32>} : memref<4x1xf32, #tpu.memory_space<vmem>>, vector<4x1xf32>,
    } else {
    }
    return
  }
  func.func @transform_0(%arg0: i32, %arg1: i32) -> (i32, i32) {
    %c0_i32 = arith.constant 0 : i32
    return %arg0, %arg1 : i32, i32
  }
  func.func @transform_1(%arg0: i32, %arg1: i32) -> (i32, i32) {
    %c0_i32 = arith.constant 0 : i32
    %c0_i32_0 = arith.constant 0 : i32
    return %arg1, %c0_i32 : i32, i32
  }
  func.func @transform_2(%arg0: i32, %arg1: i32) -> (i32, i32) {
    %c0_i32 = arith.constant 0 : i32
    %c0_i32_0 = arith.constant 0 : i32
    %c0_i32_1 = arith.constant 0 : i32
    return %c0_i32, %c0_i32_0 : i32, i32
  }
  func.func @transform_3(%arg0: i32, %arg1: i32) -> (i32, i32) {
    %c0_i32 = arith.constant 0 : i32
    %c0_i32_0 = arith.constant 0 : i32
    %c0_i32_1 = arith.constant 0 : i32
    return %c0_i32, %c0_i32_0 : i32, i32
  }
  func.func @transform_4(%arg0: i32, %arg1: i32) -> (i32, i32) {
    %c0_i32 = arith.constant 0 : i32
    %c0_i32_0 = arith.constant 0 : i32
    %c0_i32_1 = arith.constant 0 : i32
    return %c0_i32, %c0_i32_0 : i32, i32
  }
  func.func @transform_5(%arg0: i32, %arg1: i32) -> (i32, i32) {
    %c0_i32 = arith.constant 0 : i32
    %c0_i32_0 = arith.constant 0 : i32
    %c0_i32_1 = arith.constant 0 : i32
    return %c0_i32, %c0_i32_0 : i32, i32
  }
  func.func @transform_6(%arg0: i32, %arg1: i32) -> (i32, i32) {
    %c0_i32 = arith.constant 0 : i32
    %c0_i32_0 = arith.constant 0 : i32
    %c0_i32_1 = arith.constant 0 : i32
    return %c0_i32, %c0_i32_0 : i32, i32
  }
  func.func @transform_7(%arg0: i32, %arg1: i32) -> (i32, i32) {
    %c0_i32 = arith.constant 0 : i32
    %c0_i32_0 = arith.constant 0 : i32
    return %arg0, %c0_i32 : i32, i32
  }
}

</mosaic_0001>

<llo_original>
// kernel: tpu_custom_call.1
$region0: #{tpu_custom_call.1}
  #allocation0 [shape = 'u32[]', space=smem, size = 0x4, offset = 0x4, fixed_abs, tag = 'smem constant byte address 0x4 - core index']
  #allocation1 [shape = 'u32[144,128]{1,0:T(1,128)}', space=vmem, size = 0x12000, scoped, tag = 'internal scratch']
  #allocation2 [shape = 'f32[4,512]{1,0:T(4,128)}', space=vmem, size = 0x2000, scoped, tag = 'scratch operand']
  #allocation3 [shape = 'f32[1,1]{1,0:T(1,128)S(1)}', space=vmem, size = 0x200, scoped, tag = 'scoped memory for tpu_custom_call.1']
  %s0 = inlined_call_operand.hbm [shape: f32[4,6144], index: 0, kind: input, shape index: {}]
  %s1 = inlined_call_operand.hbm [shape: f32[6144,512], index: 1, kind: input, shape index: {}]
  %s2 = inlined_call_operand.hbm [shape: f32[1,512], index: 2, kind: input, shape index: {}]
  %s3 = inlined_call_operand.hbm [shape: f32[512,256], index: 3, kind: input, shape index: {}]
  %s4 = inlined_call_operand.hbm [shape: f32[1,256], index: 4, kind: input, shape index: {}]
  %s5 = inlined_call_operand.vmem [shape: f32[256,1], index: 5, kind: input, shape index: {}]
  %s6 = inlined_call_operand.<no memory space> [shape: f32[1,1], index: 6, kind: input, shape index: {}]
  %s7 = inlined_call_operand.vmem [shape: f32[4,1], index: 7, kind: output, shape index: {}]
  %s8 = sld [smem:[#allocation0]]
  $region89: #{tpu_custom_call.1} parent=0
    _
  %s10 = ssub.s32 1, %s8
  %s11 = scalar_select 0, %s10, %s8
  %v12 = vstv %s6
  %13 = vst [vmem:[#allocation3] sm:$0x1] %v12
  $region1: #{tpu_custom_call.1} parent=0
    #allocation4 [shape = 'u8[32768]{0}', space=vmem, size = 0x8000, scoped, tag = 'input window, operand 0']
    #allocation5 [shape = 's32[2]{0}', space=sflag, size = 0x8, scoped, tag = 'scoped memory for tpu_custom_call.1']
    #allocation6 [shape = 'u8[4194304]{0}', space=vmem, size = 0x400000, scoped, tag = 'input window, operand 1']
    #allocation7 [shape = 's32[2]{0}', space=sflag, size = 0x8, scoped, tag = 'scoped memory for tpu_custom_call.1']
    #allocation8 [shape = 'u8[2048]{0}', space=vmem, size = 0x800, scoped, tag = 'input window, operand 2, single buffered']
    #allocation9 [shape = 'u8[524288]{0}', space=vmem, size = 0x80000, scoped, tag = 'input window, operand 3, single buffered']
    #allocation10 [shape = 's32[1]{0}', space=sflag, size = 0x4, scoped, tag = 'scoped memory for tpu_custom_call.1']
    #allocation11 [shape = 'u8[1024]{0}', space=vmem, size = 0x400, scoped, tag = 'input window, operand 4, single buffered']
    %14 = vsyncpa [#allocation5], 0
    %s15 = scalar_lea.sflag [#allocation5], 1
    %16 = vsyncpa %s15, 0
    %17 = vsyncpa [#allocation7], 0
    %s18 = scalar_lea.sflag [#allocation7], 1
    %19 = vsyncpa %s18, 0
    %20 = vsyncpa [#allocation10], 0
    loop: start=0, step=1, limit=8
    $region2: #{tpu_custom_call.1} parent=1 // loop_pre_header
      _
    $region3: #{tpu_custom_call.1} parent=1 // loop_header
      %s22 = sphi 0, %s26
      %p23 = scmp.ge.s32.totalorder %s22, 8
      %s29 = sphi 0, %s41
      %s30 = sphi 0, %s37
      %s31 = sphi 0, %s29
      %s32 = sphi 0, %s30
      %s33 = sphi 0, %s31
      %s34 = sphi 0, %s32
      %s46 = sphi 0, %s48
      %s49 = sphi 0, %s46
      %s50 = sphi 0, %s49
      %s66 = sphi 0, %s50
      %s72 = sphi 0, %s74
      %s75 = sphi 0, %s72
      %s76 = sphi 0, %s75
      %s92 = sphi 0, %s76
      %s96 = sphi 0, %s96
      %s98 = sphi 0, %s96
      %s99 = sphi 0, %s98
      %s113 = sphi 0, %s99
      %s117 = sphi 0, %s117
      %s119 = sphi 0, %s117
      %s120 = sphi 0, %s119
      %s134 = sphi 0, %s120
      %s138 = sphi 0, %s138
      %s140 = sphi 0, %s138
      %s141 = sphi 0, %s140
      %s155 = sphi 0, %s141
      %s159 = sphi 0, %s159
      %s161 = sphi 0, %s159
      %s162 = sphi 0, %s161
      %s176 = sphi 0, %s162
      %s180 = sphi 0, %s180
      %s182 = sphi 0, %s180
      %s183 = sphi 0, %s182
      %s197 = sphi 0, %s183
      %s203 = sphi 0, %s205
      %s206 = sphi 0, %s203
      %s207 = sphi 0, %s206
      %s223 = sphi 0, %s207
    $region4: #{tpu_custom_call.1} parent=1 // loop_header_branch
      %25 = sbr.rel (%p23) target = $region8
    $region5: #{tpu_custom_call.1} parent=1 // loop_body
      %s27 = ssub.s32 %s22, 1
      %s28 = ssub.s32 %s22, 2
      %s35 = sadd.s32 1, %s30
      %p36 = scmp.ge.s32.totalorder %s35, 6
      %s37 = scalar_select %p36, 0, %s35
      %s38 = sadd.s32 1, %s29
      %s39 = scalar_select %p36, %s38, %s29
      %p40 = scmp.ge.s32.totalorder %s39, 1
      %s41 = scalar_select %p40, 0, %s39
      %s42 = ssub.s32 %s29, %s41
      %s43 = ssub.s32 %s30, %s37
      %s44 = sor.u32 %s42, %s43
      %p45 = scmp.eq.s32.totalorder %s44, 0
      %s47 = sadd.s32 %s46, 1
      %s48 = scalar_select %p45, %s46, %s47
      %p51 = pneg %p45
      %p52 = scmp.eq.s32.totalorder %s22, 5
      %p53 = por %p51, %p52
      %p54 = scmp.ne.s32.totalorder %s46, %s49
      %p55 = scmp.eq.s32.totalorder %s22, 0
      %p56 = por %p54, %p55
      %p57 = scmp.ne.s32.totalorder %s46, %s49
      %p58 = scmp.eq.s32.totalorder %s27, 5
      %p59 = por %p57, %p58
      %p60 = scmp.ne.s32.totalorder %s49, %s50
      %p61 = scmp.eq.s32.totalorder %s27, 0
      %p62 = por %p60, %p61
      %p63 = scmp.ne.s32.totalorder %s49, %s50
      %p64 = scmp.eq.s32.totalorder %s28, 5
      %p65 = por %p63, %p64
      %p67 = scmp.ne.s32.totalorder %s50, %s66
      %p68 = scmp.eq.s32.totalorder %s28, 0
      %p69 = por %p67, %p68
      %s70 = ssub.s32 %s30, %s37
      %p71 = scmp.eq.s32.totalorder %s70, 0
      %s73 = sadd.s32 %s72, 1
      %s74 = scalar_select %p71, %s72, %s73
      %p77 = pneg %p71
      %p78 = scmp.eq.s32.totalorder %s22, 5
      %p79 = por %p77, %p78
      %p80 = scmp.ne.s32.totalorder %s72, %s75
      %p81 = scmp.eq.s32.totalorder %s22, 0
      %p82 = por %p80, %p81
      %p83 = scmp.ne.s32.totalorder %s72, %s75
      %p84 = scmp.eq.s32.totalorder %s27, 5
      %p85 = por %p83, %p84
      %p86 = scmp.ne.s32.totalorder %s75, %s76
      %p87 = scmp.eq.s32.totalorder %s27, 0
      %p88 = por %p86, %p87
      %p89 = scmp.ne.s32.totalorder %s75, %s76
      %p90 = scmp.eq.s32.totalorder %s28, 5
      %p91 = por %p89, %p90
      %p93 = scmp.ne.s32.totalorder %s76, %s92
      %p94 = scmp.eq.s32.totalorder %s28, 0
      %p95 = por %p93, %p94
      %s97 = sadd.s32 %s96, 1
      %p100 = scmp.eq.s32.totalorder %s22, 5
      %p101 = scmp.ne.s32.totalorder %s96, %s98
      %p102 = scmp.eq.s32.totalorder %s22, 0
      %p103 = por %p101, %p102
      %p104 = scmp.ne.s32.totalorder %s96, %s98
      %p105 = scmp.eq.s32.totalorder %s27, 5
      %p106 = por %p104, %p105
      %p107 = scmp.ne.s32.totalorder %s98, %s99
      %p108 = scmp.eq.s32.totalorder %s27, 0
      %p109 = por %p107, %p108
      %p110 = scmp.ne.s32.totalorder %s98, %s99
      %p111 = scmp.eq.s32.totalorder %s28, 5
      %p112 = por %p110, %p111
      %p114 = scmp.ne.s32.totalorder %s99, %s113
      %p115 = scmp.eq.s32.totalorder %s28, 0
      %p116 = por %p114, %p115
      %s118 = sadd.s32 %s117, 1
      %p121 = scmp.eq.s32.totalorder %s22, 5
      %p122 = scmp.ne.s32.totalorder %s117, %s119
      %p123 = scmp.eq.s32.totalorder %s22, 0
      %p124 = por %p122, %p123
      %p125 = scmp.ne.s32.totalorder %s117, %s119
      %p126 = scmp.eq.s32.totalorder %s27, 5
      %p127 = por %p125, %p126
      %p128 = scmp.ne.s32.totalorder %s119, %s120
      %p129 = scmp.eq.s32.totalorder %s27, 0
      %p130 = por %p128, %p129
      %p131 = scmp.ne.s32.totalorder %s119, %s120
      %p132 = scmp.eq.s32.totalorder %s28, 5
      %p133 = por %p131, %p132
      %p135 = scmp.ne.s32.totalorder %s120, %s134
      %p136 = scmp.eq.s32.totalorder %s28, 0
      %p137 = por %p135, %p136
      %s139 = sadd.s32 %s138, 1
      %p142 = scmp.eq.s32.totalorder %s22, 5
      %p143 = scmp.ne.s32.totalorder %s138, %s140
      %p144 = scmp.eq.s32.totalorder %s22, 0
      %p145 = por %p143, %p144
      %p146 = scmp.ne.s32.totalorder %s138, %s140
      %p147 = scmp.eq.s32.totalorder %s27, 5
      %p148 = por %p146, %p147
      %p149 = scmp.ne.s32.totalorder %s140, %s141
      %p150 = scmp.eq.s32.totalorder %s27, 0
      %p151 = por %p149, %p150
      %p152 = scmp.ne.s32.totalorder %s140, %s141
      %p153 = scmp.eq.s32.totalorder %s28, 5
      %p154 = por %p152, %p153
      %p156 = scmp.ne.s32.totalorder %s141, %s155
      %p157 = scmp.eq.s32.totalorder %s28, 0
      %p158 = por %p156, %p157
      %s160 = sadd.s32 %s159, 1
      %p163 = scmp.eq.s32.totalorder %s22, 5
      %p164 = scmp.ne.s32.totalorder %s159, %s161
      %p165 = scmp.eq.s32.totalorder %s22, 0
      %p166 = por %p164, %p165
      %p167 = scmp.ne.s32.totalorder %s159, %s161
      %p168 = scmp.eq.s32.totalorder %s27, 5
      %p169 = por %p167, %p168
      %p170 = scmp.ne.s32.totalorder %s161, %s162
      %p171 = scmp.eq.s32.totalorder %s27, 0
      %p172 = por %p170, %p171
      %p173 = scmp.ne.s32.totalorder %s161, %s162
      %p174 = scmp.eq.s32.totalorder %s28, 5
      %p175 = por %p173, %p174
      %p177 = scmp.ne.s32.totalorder %s162, %s176
      %p178 = scmp.eq.s32.totalorder %s28, 0
      %p179 = por %p177, %p178
      %s181 = sadd.s32 %s180, 1
      %p184 = scmp.eq.s32.totalorder %s22, 5
      %p185 = scmp.ne.s32.totalorder %s180, %s182
      %p186 = scmp.eq.s32.totalorder %s22, 0
      %p187 = por %p185, %p186
      %p188 = scmp.ne.s32.totalorder %s180, %s182
      %p189 = scmp.eq.s32.totalorder %s27, 5
      %p190 = por %p188, %p189
      %p191 = scmp.ne.s32.totalorder %s182, %s183
      %p192 = scmp.eq.s32.totalorder %s27, 0
      %p193 = por %p191, %p192
      %p194 = scmp.ne.s32.totalorder %s182, %s183
      %p195 = scmp.eq.s32.totalorder %s28, 5
      %p196 = por %p194, %p195
      %p198 = scmp.ne.s32.totalorder %s183, %s197
      %p199 = scmp.eq.s32.totalorder %s28, 0
      %p200 = por %p198, %p199
      %s201 = ssub.s32 %s29, %s41
      %p202 = scmp.eq.s32.totalorder %s201, 0
      %s204 = sadd.s32 %s203, 1
      %s205 = scalar_select %p202, %s203, %s204
      %p208 = pneg %p202
      %p209 = scmp.eq.s32.totalorder %s22, 5
      %p210 = por %p208, %p209
      %p211 = scmp.ne.s32.totalorder %s203, %s206
      %p212 = scmp.eq.s32.totalorder %s22, 0
      %p213 = por %p211, %p212
      %p214 = scmp.ne.s32.totalorder %s203, %s206
      %p215 = scmp.eq.s32.totalorder %s27, 5
      %p216 = por %p214, %p215
      %p217 = scmp.ne.s32.totalorder %s206, %s207
      %p218 = scmp.eq.s32.totalorder %s27, 0
      %p219 = por %p217, %p218
      %p220 = scmp.ne.s32.totalorder %s206, %s207
      %p221 = scmp.eq.s32.totalorder %s28, 5
      %p222 = por %p220, %p221
      %p224 = scmp.ne.s32.totalorder %s207, %s223
      %p225 = scmp.eq.s32.totalorder %s28, 0
      %p226 = por %p224, %p225
      %p227 = scmp.le.s32.totalorder 1, %s22
      %p228 = scmp.lt.s32.totalorder %s22, 7
      %p229 = pnand %p227, %p228
      %p230 = pneg %p229
      // Predicated region
      $region9: #{tpu_custom_call.1} parent=5 // pred_check
        _
      $region10: #{tpu_custom_call.1} parent=5 // pred_check_branch
        %232 = sbr.rel (%p229) target = $region12
      $region11: #{tpu_custom_call.1} parent=5 // pred_region
        %s233 = ssub.s32 %s22, 1
        // Predicated region
        $region13: #{tpu_custom_call.1} parent=11 // pred_check
          %p234 = pneg %p109
        $region14: #{tpu_custom_call.1} parent=11 // pred_check_branch
          %236 = sbr.rel (%p234) target = $region16
        $region15: #{tpu_custom_call.1} parent=11 // pred_region
          %s238 = ssub.s32 64, 64
          %239 = vsyncadd [#allocation7], %s238
          %s241 = sshll.u32 [#allocation8], 4
          %s242 = int_to_ptr.vmem [resolvable:$true] %s241
          %244 = dma.hbm_to_vmem [thread:$0]  %s2, 64, %s242, [#allocation7]
        $region16: #{tpu_custom_call.1} parent=11 // pred_fallthru
          _
        // Predicated region
        $region17: #{tpu_custom_call.1} parent=11 // pred_check
          %p245 = pneg %p130
        $region18: #{tpu_custom_call.1} parent=11 // pred_check_branch
          %247 = sbr.rel (%p245) target = $region20
        $region19: #{tpu_custom_call.1} parent=11 // pred_region
          %s249 = ssub.s32 16384, 16384
          %250 = vsyncadd [#allocation10], %s249
          %s251 = sshll.u32 [#allocation9], 4
          %s252 = int_to_ptr.vmem [resolvable:$true] %s251
          %257 = dma.hbm_to_vmem [thread:$0]  %s3, 16384, %s252, [#allocation10], 256, 256, 16
        $region20: #{tpu_custom_call.1} parent=11 // pred_fallthru
          _
        // Predicated region
        $region21: #{tpu_custom_call.1} parent=11 // pred_check
          %p258 = pneg %p151
        $region22: #{tpu_custom_call.1} parent=11 // pred_check_branch
          %260 = sbr.rel (%p258) target = $region24
        $region23: #{tpu_custom_call.1} parent=11 // pred_region
          %s262 = ssub.s32 32, 32
          %263 = vsyncadd [#allocation10], %s262
          %s265 = sshll.u32 [#allocation11], 4
          %s266 = int_to_ptr.vmem [resolvable:$true] %s265
          %268 = dma.hbm_to_vmem [thread:$0]  %s4, 32, %s266, [#allocation10]
        $region24: #{tpu_custom_call.1} parent=11 // pred_fallthru
          _
        // Predicated region
        $region25: #{tpu_custom_call.1} parent=11 // pred_check
          %p269 = pneg %p172
        $region26: #{tpu_custom_call.1} parent=11 // pred_check_branch
          %271 = sbr.rel (%p269) target = $region28
        $region27: #{tpu_custom_call.1} parent=11 // pred_region
          _
        $region28: #{tpu_custom_call.1} parent=11 // pred_fallthru
          _
        // Predicated region
        $region29: #{tpu_custom_call.1} parent=11 // pred_check
          %p272 = pneg %p193
        $region30: #{tpu_custom_call.1} parent=11 // pred_check_branch
          %274 = sbr.rel (%p272) target = $region32
        $region31: #{tpu_custom_call.1} parent=11 // pred_region
          _
        $region32: #{tpu_custom_call.1} parent=11 // pred_fallthru
          _
      $region12: #{tpu_custom_call.1} parent=5 // pred_fallthru
        _
      %p275 = scmp.lt.s32.totalorder %s22, 6
      // Predicated region
      $region33: #{tpu_custom_call.1} parent=5 // pred_check
        %p276 = pneg %p275
      $region34: #{tpu_custom_call.1} parent=5 // pred_check_branch
        %278 = sbr.rel (%p276) target = $region36
      $region35: #{tpu_custom_call.1} parent=5 // pred_region
        // Predicated region
        $region37: #{tpu_custom_call.1} parent=35 // pred_check
          %p279 = pneg %p56
        $region38: #{tpu_custom_call.1} parent=35 // pred_check_branch
          %281 = sbr.rel (%p279) target = $region40
        $region39: #{tpu_custom_call.1} parent=35 // pred_region
          %s282 = sand.u32 %s46, 1
          %s283 = scalar_lea.sflag [#allocation5], %s282
          %s284 = sand.u32 %s46, 1
          %s285 = smul.addr %s284, 32
          %s286 = scalar_lea.vmem [#allocation4], %s285
          %s287 = smul.u32 8, %s30
          %s289 = ssub.s32 512, 512
          %290 = vsyncadd %s283, %s289
          %s291 = smul.addr %s29, 48
          %s292 = sadd.s32 %s287, %s291
          %s293 = smul.addr %s292, 64
          %s294 = scalar_lea.hbm %s0, %s293
          %s296 = sshll.u32 %s286, 4
          %s297 = int_to_ptr.vmem [resolvable:$true] %s296
          %299 = dma.hbm_to_vmem [thread:$0]  %s294, 512, %s297, %s283
        $region40: #{tpu_custom_call.1} parent=35 // pred_fallthru
          _
        // Predicated region
        $region41: #{tpu_custom_call.1} parent=35 // pred_check
          %p300 = pneg %p82
        $region42: #{tpu_custom_call.1} parent=35 // pred_check_branch
          %302 = sbr.rel (%p300) target = $region44
        $region43: #{tpu_custom_call.1} parent=35 // pred_region
          %s303 = sand.u32 %s22, 1
          %s304 = scalar_lea.sflag [#allocation7], %s303
          %s305 = sand.u32 %s72, 1
          %s306 = smul.addr %s305, 4096
          %s307 = scalar_lea.vmem [#allocation6], %s306
          %s308 = smul.u32 128, %s30
          %s310 = ssub.s32 65536, 65536
          %311 = vsyncadd %s304, %s310
          %s312 = smul.addr %s308, 4
          %s313 = smul.addr %s312, 128
          %s314 = scalar_lea.hbm %s1, %s313
          %s315 = sshll.u32 %s307, 4
          %s316 = int_to_ptr.vmem [resolvable:$true] %s315
          %321 = dma.hbm_to_vmem [thread:$0]  %s314, 65536, %s316, %s304, 512, 512, 32
        $region44: #{tpu_custom_call.1} parent=35 // pred_fallthru
          _
      $region36: #{tpu_custom_call.1} parent=5 // pred_fallthru
        _
      %p322 = scmp.le.s32.totalorder 1, %s22
      %p323 = scmp.lt.s32.totalorder %s22, 7
      %p324 = pnand %p322, %p323
      %p325 = pneg %p324
      // Predicated region
      $region45: #{tpu_custom_call.1} parent=5 // pred_check
        _
      $region46: #{tpu_custom_call.1} parent=5 // pred_check_branch
        %327 = sbr.rel (%p324) target = $region48
      $region47: #{tpu_custom_call.1} parent=5 // pred_region
        %s328 = ssub.s32 %s22, 1
        %s329 = sand.u32 %s49, 1
        %s330 = scalar_lea.sflag [#allocation5], %s329
        %s331 = sand.u32 %s49, 1
        %s332 = smul.addr %s331, 32
        %s333 = scalar_lea.vmem [#allocation4], %s332
        // Predicated region
        $region49: #{tpu_custom_call.1} parent=47 // pred_check
          %p334 = pneg %p62
        $region50: #{tpu_custom_call.1} parent=47 // pred_check_branch
          %336 = sbr.rel (%p334) target = $region52
        $region51: #{tpu_custom_call.1} parent=47 // pred_region
          %337 = dma.done %s330, 512
        $region52: #{tpu_custom_call.1} parent=47 // pred_fallthru
          _
        %s338 = sand.u32 %s27, 1
        %s339 = scalar_lea.sflag [#allocation7], %s338
        %s340 = sand.u32 %s75, 1
        %s341 = smul.addr %s340, 4096
        %s342 = scalar_lea.vmem [#allocation6], %s341
        // Predicated region
        $region53: #{tpu_custom_call.1} parent=47 // pred_check
          %p343 = pneg %p88
        $region54: #{tpu_custom_call.1} parent=47 // pred_check_branch
          %345 = sbr.rel (%p343) target = $region56
        $region55: #{tpu_custom_call.1} parent=47 // pred_region
          %346 = dma.done %s339, 65536
        $region56: #{tpu_custom_call.1} parent=47 // pred_fallthru
          _
        // Predicated region
        $region57: #{tpu_custom_call.1} parent=47 // pred_check
          %p347 = pneg %p109
        $region58: #{tpu_custom_call.1} parent=47 // pred_check_branch
          %349 = sbr.rel (%p347) target = $region60
        $region59: #{tpu_custom_call.1} parent=47 // pred_region
          %350 = dma.done [#allocation7], 64
        $region60: #{tpu_custom_call.1} parent=47 // pred_fallthru
          _
        // Predicated region
        $region61: #{tpu_custom_call.1} parent=47 // pred_check
          %p351 = pneg %p130
        $region62: #{tpu_custom_call.1} parent=47 // pred_check_branch
          %353 = sbr.rel (%p351) target = $region64
        $region63: #{tpu_custom_call.1} parent=47 // pred_region
          %354 = dma.done [#allocation10], 16384
        $region64: #{tpu_custom_call.1} parent=47 // pred_fallthru
          _
        // Predicated region
        $region65: #{tpu_custom_call.1} parent=47 // pred_check
          %p355 = pneg %p151
        $region66: #{tpu_custom_call.1} parent=47 // pred_check_branch
          %357 = sbr.rel (%p355) target = $region68
        $region67: #{tpu_custom_call.1} parent=47 // pred_region
          %358 = dma.done [#allocation10], 32
        $region68: #{tpu_custom_call.1} parent=47 // pred_fallthru
          _
        %s359 = sand.u32 %s49, 1
        %s360 = scalar_lea.sflag [#allocation5], %s359
        %s361 = sand.u32 %s49, 1
        %s362 = smul.addr %s361, 32
        %s363 = scalar_lea.vmem [#allocation4], %s362
        %p364 = pneg %p62
        %p365 = pneg %p59
        %s366 = sand.u32 %s27, 1
        %s367 = scalar_lea.sflag [#allocation7], %s366
        %s368 = sand.u32 %s75, 1
        %s369 = smul.addr %s368, 4096
        %s370 = scalar_lea.vmem [#allocation6], %s369
        %p371 = pneg %p88
        %p372 = pneg %p85
        %p373 = pneg %p109
        %p374 = pneg %p106
        %p375 = pneg %p130
        %p376 = pneg %p127
        %p377 = pneg %p151
        %p378 = pneg %p148
        %p379 = pneg %p172
        %p380 = pneg %p169
        %p381 = pneg %p193
        %p382 = pneg %p190
        %p383 = pneg %p219
        %p384 = pneg %p216
        %p385 = scmp.lt.s32.totalorder %s31, 0
        %s386 = scalar_select %p385, %s31, 0
        %s387 = smul.addr %s386, 4
        %s388 = scalar_lea.vmem %s7, %s387
        %s389 = smul.u32 8, %s32
        %s390 = smul.u32 128, %s32
        %p391 = scmp.lt.s32.totalorder %s31, 0
        %s392 = scalar_select %p391, %s31, 0
        %s393 = smul.addr %s392, 4
        %s394 = scalar_lea.vmem %s7, %s393
        %p395 = scmp.eq.s32.totalorder %s32, 0
        // Predicated region
        $region69: #{tpu_custom_call.1} parent=47 // pred_check
          %p396 = pneg %p395
        $region70: #{tpu_custom_call.1} parent=47 // pred_check_branch
          %398 = sbr.rel (%p396) target = $region72
        $region71: #{tpu_custom_call.1} parent=47 // pred_region
          %399 = vst [vmem:[#allocation2] sm:$0xff] 0.0
          %400 = vst [vmem:[#allocation2 + $0x8] sm:$0xff] 0.0
        $region72: #{tpu_custom_call.1} parent=47 // pred_fallthru
          _
        %v401 = vld [vmem:[#allocation2] sm:$0xff]
        %v402 = vld [vmem:[#allocation2 + $0x8] sm:$0xff]
        %v403 = vld [vmem:[%s333] sm:$0xff]
        %v404 = vld [vmem:[%s333 + $0x8] sm:$0xff]
        %v405 = vld [vmem:[%s333 + $0x10] sm:$0xff]
        %v406 = vld [vmem:[%s333 + $0x18] sm:$0xff]
        %v407 = vld [vmem:[%s342] sm:$0xff]
        %v408 = vld [vmem:[%s342 + $0x8] sm:$0xff]
        %v409 = vld [vmem:[%s342 + $0x10] sm:$0xff]
        %v410 = vld [vmem:[%s342 + $0x18] sm:$0xff]
        %v411 = vld [vmem:[%s342 + $0x20] sm:$0xff]
        %v412 = vld [vmem:[%s342 + $0x28] sm:$0xff]
        %v413 = vld [vmem:[%s342 + $0x30] sm:$0xff]
        %v414 = vld [vmem:[%s342 + $0x38] sm:$0xff]
        %v415 = vld [vmem:[%s342 + $0x40] sm:$0xff]
        %v416 = vld [vmem:[%s342 + $0x48] sm:$0xff]
        %v417 = vld [vmem:[%s342 + $0x50] sm:$0xff]
        %v418 = vld [vmem:[%s342 + $0x58] sm:$0xff]
        %v419 = vld [vmem:[%s342 + $0x60] sm:$0xff]
        %v420 = vld [vmem:[%s342 + $0x68] sm:$0xff]
        %v421 = vld [vmem:[%s342 + $0x70] sm:$0xff]
        %v422 = vld [vmem:[%s342 + $0x78] sm:$0xff]
        %v423 = vld [vmem:[%s342 + $0x80] sm:$0xff]
        %v424 = vld [vmem:[%s342 + $0x88] sm:$0xff]
        %v425 = vld [vmem:[%s342 + $0x90] sm:$0xff]
        %v426 = vld [vmem:[%s342 + $0x98] sm:$0xff]
        %v427 = vld [vmem:[%s342 + $0xa0] sm:$0xff]
        %v428 = vld [vmem:[%s342 + $0xa8] sm:$0xff]
        %v429 = vld [vmem:[%s342 + $0xb0] sm:$0xff]
        %v430 = vld [vmem:[%s342 + $0xb8] sm:$0xff]
        %v431 = vld [vmem:[%s342 + $0xc0] sm:$0xff]
        %v432 = vld [vmem:[%s342 + $0xc8] sm:$0xff]
        %v433 = vld [vmem:[%s342 + $0xd0] sm:$0xff]
        %v434 = vld [vmem:[%s342 + $0xd8] sm:$0xff]
        %v435 = vld [vmem:[%s342 + $0xe0] sm:$0xff]
        %v436 = vld [vmem:[%s342 + $0xe8] sm:$0xff]
        %v437 = vld [vmem:[%s342 + $0xf0] sm:$0xff]
        %v438 = vld [vmem:[%s342 + $0xf8] sm:$0xff]
        %v439 = vld [vmem:[%s342 + $0x100] sm:$0xff]
        %v440 = vld [vmem:[%s342 + $0x108] sm:$0xff]
        %v441 = vld [vmem:[%s342 + $0x110] sm:$0xff]
        %v442 = vld [vmem:[%s342 + $0x118] sm:$0xff]
        %v443 = vld [vmem:[%s342 + $0x120] sm:$0xff]
        %v444 = vld [vmem:[%s342 + $0x128] sm:$0xff]
        %v445 = vld [vmem:[%s342 + $0x130] sm:$0xff]
        %v446 = vld [vmem:[%s342 + $0x138] sm:$0xff]
        %v447 = vld [vmem:[%s342 + $0x140] sm:$0xff]
        %v448 = vld [vmem:[%s342 + $0x148] sm:$0xff]
        %v449 = vld [vmem:[%s342 + $0x150] sm:$0xff]
        %v450 = vld [vmem:[%s342 + $0x158] sm:$0xff]
        %v451 = vld [vmem:[%s342 + $0x160] sm:$0xff]
        %v452 = vld [vmem:[%s342 + $0x168] sm:$0xff]
        %v453 = vld [vmem:[%s342 + $0x170] sm:$0xff]
        %v454 = vld [vmem:[%s342 + $0x178] sm:$0xff]
        %v455 = vld [vmem:[%s342 + $0x180] sm:$0xff]
        %v456 = vld [vmem:[%s342 + $0x188] sm:$0xff]
        %v457 = vld [vmem:[%s342 + $0x190] sm:$0xff]
        %v458 = vld [vmem:[%s342 + $0x198] sm:$0xff]
        %v459 = vld [vmem:[%s342 + $0x1a0] sm:$0xff]
        %v460 = vld [vmem:[%s342 + $0x1a8] sm:$0xff]
        %v461 = vld [vmem:[%s342 + $0x1b0] sm:$0xff]
        %v462 = vld [vmem:[%s342 + $0x1b8] sm:$0xff]
        %v463 = vld [vmem:[%s342 + $0x1c0] sm:$0xff]
        %v464 = vld [vmem:[%s342 + $0x1c8] sm:$0xff]
        %v465 = vld [vmem:[%s342 + $0x1d0] sm:$0xff]
        %v466 = vld [vmem:[%s342 + $0x1d8] sm:$0xff]
        %v467 = vld [vmem:[%s342 + $0x1e0] sm:$0xff]
        %v468 = vld [vmem:[%s342 + $0x1e8] sm:$0xff]
        %v469 = vld [vmem:[%s342 + $0x1f0] sm:$0xff]
        %v470 = vld [vmem:[%s342 + $0x1f8] sm:$0xff]
        %v471 = vld [vmem:[%s342 + $0x200] sm:$0xff]
        %v472 = vld [vmem:[%s342 + $0x208] sm:$0xff]
        %v473 = vld [vmem:[%s342 + $0x210] sm:$0xff]
        %v474 = vld [vmem:[%s342 + $0x218] sm:$0xff]
        %v475 = vld [vmem:[%s342 + $0x220] sm:$0xff]
        %v476 = vld [vmem:[%s342 + $0x228] sm:$0xff]
        %v477 = vld [vmem:[%s342 + $0x230] sm:$0xff]
        %v478 = vld [vmem:[%s342 + $0x238] sm:$0xff]
        %v479 = vld [vmem:[%s342 + $0x240] sm:$0xff]
        %v480 = vld [vmem:[%s342 + $0x248] sm:$0xff]
        %v481 = vld [vmem:[%s342 + $0x250] sm:$0xff]
        %v482 = vld [vmem:[%s342 + $0x258] sm:$0xff]
        %v483 = vld [vmem:[%s342 + $0x260] sm:$0xff]
        %v484 = vld [vmem:[%s342 + $0x268] sm:$0xff]
        %v485 = vld [vmem:[%s342 + $0x270] sm:$0xff]
        %v486 = vld [vmem:[%s342 + $0x278] sm:$0xff]
        %v487 = vld [vmem:[%s342 + $0x280] sm:$0xff]
        %v488 = vld [vmem:[%s342 + $0x288] sm:$0xff]
        %v489 = vld [vmem:[%s342 + $0x290] sm:$0xff]
        %v490 = vld [vmem:[%s342 + $0x298] sm:$0xff]
        %v491 = vld [vmem:[%s342 + $0x2a0] sm:$0xff]
        %v492 = vld [vmem:[%s342 + $0x2a8] sm:$0xff]
        %v493 = vld [vmem:[%s342 + $0x2b0] sm:$0xff]
        %v494 = vld [vmem:[%s342 + $0x2b8] sm:$0xff]
        %v495 = vld [vmem:[%s342 + $0x2c0] sm:$0xff]
        %v496 = vld [vmem:[%s342 + $0x2c8] sm:$0xff]
        %v497 = vld [vmem:[%s342 + $0x2d0] sm:$0xff]
        %v498 = vld [vmem:[%s342 + $0x2d8] sm:$0xff]
        %v499 = vld [vmem:[%s342 + $0x2e0] sm:$0xff]
        %v500 = vld [vmem:[%s342 + $0x2e8] sm:$0xff]
        %v501 = vld [vmem:[%s342 + $0x2f0] sm:$0xff]
        %v502 = vld [vmem:[%s342 + $0x2f8] sm:$0xff]
        %v503 = vld [vmem:[%s342 + $0x300] sm:$0xff]
        %v504 = vld [vmem:[%s342 + $0x308] sm:$0xff]
        %v505 = vld [vmem:[%s342 + $0x310] sm:$0xff]
        %v506 = vld [vmem:[%s342 + $0x318] sm:$0xff]
        %v507 = vld [vmem:[%s342 + $0x320] sm:$0xff]
        %v508 = vld [vmem:[%s342 + $0x328] sm:$0xff]
        %v509 = vld [vmem:[%s342 + $0x330] sm:$0xff]
        %v510 = vld [vmem:[%s342 + $0x338] sm:$0xff]
        %v511 = vld [vmem:[%s342 + $0x340] sm:$0xff]
        %v512 = vld [vmem:[%s342 + $0x348] sm:$0xff]
        %v513 = vld [vmem:[%s342 + $0x350] sm:$0xff]
        %v514 = vld [vmem:[%s342 + $0x358] sm:$0xff]
        %v515 = vld [vmem:[%s342 + $0x360] sm:$0xff]
        %v516 = vld [vmem:[%s342 + $0x368] sm:$0xff]
        %v517 = vld [vmem:[%s342 + $0x370] sm:$0xff]
        %v518 = vld [vmem:[%s342 + $0x378] sm:$0xff]
        %v519 = vld [vmem:[%s342 + $0x380] sm:$0xff]
        %v520 = vld [vmem:[%s342 + $0x388] sm:$0xff]
        %v521 = vld [vmem:[%s342 + $0x390] sm:$0xff]
        %v522 = vld [vmem:[%s342 + $0x398] sm:$0xff]
        %v523 = vld [vmem:[%s342 + $0x3a0] sm:$0xff]
        %v524 = vld [vmem:[%s342 + $0x3a8] sm:$0xff]
        %v525 = vld [vmem:[%s342 + $0x3b0] sm:$0xff]
        %v526 = vld [vmem:[%s342 + $0x3b8] sm:$0xff]
        %v527 = vld [vmem:[%s342 + $0x3c0] sm:$0xff]
        %v528 = vld [vmem:[%s342 + $0x3c8] sm:$0xff]
        %v529 = vld [vmem:[%s342 + $0x3d0] sm:$0xff]
        %v530 = vld [vmem:[%s342 + $0x3d8] sm:$0xff]
        %v531 = vld [vmem:[%s342 + $0x3e0] sm:$0xff]
        %v532 = vld [vmem:[%s342 + $0x3e8] sm:$0xff]
        %v533 = vld [vmem:[%s342 + $0x3f0] sm:$0xff]
        %v534 = vld [vmem:[%s342 + $0x3f8] sm:$0xff]
        %v535 = vld [vmem:[%s342 + $0x400] sm:$0xff]
        %v536 = vld [vmem:[%s342 + $0x408] sm:$0xff]
        %v537 = vld [vmem:[%s342 + $0x410] sm:$0xff]
        %v538 = vld [vmem:[%s342 + $0x418] sm:$0xff]
        %v539 = vld [vmem:[%s342 + $0x420] sm:$0xff]
        %v540 = vld [vmem:[%s342 + $0x428] sm:$0xff]
        %v541 = vld [vmem:[%s342 + $0x430] sm:$0xff]
        %v542 = vld [vmem:[%s342 + $0x438] sm:$0xff]
        %v543 = vld [vmem:[%s342 + $0x440] sm:$0xff]
        %v544 = vld [vmem:[%s342 + $0x448] sm:$0xff]
        %v545 = vld [vmem:[%s342 + $0x450] sm:$0xff]
        %v546 = vld [vmem:[%s342 + $0x458] sm:$0xff]
        %v547 = vld [vmem:[%s342 + $0x460] sm:$0xff]
        %v548 = vld [vmem:[%s342 + $0x468] sm:$0xff]
        %v549 = vld [vmem:[%s342 + $0x470] sm:$0xff]
        %v550 = vld [vmem:[%s342 + $0x478] sm:$0xff]
        %v551 = vld [vmem:[%s342 + $0x480] sm:$0xff]
        %v552 = vld [vmem:[%s342 + $0x488] sm:$0xff]
        %v553 = vld [vmem:[%s342 + $0x490] sm:$0xff]
        %v554 = vld [vmem:[%s342 + $0x498] sm:$0xff]
        %v555 = vld [vmem:[%s342 + $0x4a0] sm:$0xff]
        %v556 = vld [vmem:[%s342 + $0x4a8] sm:$0xff]
        %v557 = vld [vmem:[%s342 + $0x4b0] sm:$0xff]
        %v558 = vld [vmem:[%s342 + $0x4b8] sm:$0xff]
        %v559 = vld [vmem:[%s342 + $0x4c0] sm:$0xff]
        %v560 = vld [vmem:[%s342 + $0x4c8] sm:$0xff]
        %v561 = vld [vmem:[%s342 + $0x4d0] sm:$0xff]
        %v562 = vld [vmem:[%s342 + $0x4d8] sm:$0xff]
        %v563 = vld [vmem:[%s342 + $0x4e0] sm:$0xff]
        %v564 = vld [vmem:[%s342 + $0x4e8] sm:$0xff]
        %v565 = vld [vmem:[%s342 + $0x4f0] sm:$0xff]
        %v566 = vld [vmem:[%s342 + $0x4f8] sm:$0xff]
        %v567 = vld [vmem:[%s342 + $0x500] sm:$0xff]
        %v568 = vld [vmem:[%s342 + $0x508] sm:$0xff]
        %v569 = vld [vmem:[%s342 + $0x510] sm:$0xff]
        %v570 = vld [vmem:[%s342 + $0x518] sm:$0xff]
        %v571 = vld [vmem:[%s342 + $0x520] sm:$0xff]
        %v572 = vld [vmem:[%s342 + $0x528] sm:$0xff]
        %v573 = vld [vmem:[%s342 + $0x530] sm:$0xff]
        %v574 = vld [vmem:[%s342 + $0x538] sm:$0xff]
        %v575 = vld [vmem:[%s342 + $0x540] sm:$0xff]
        %v576 = vld [vmem:[%s342 + $0x548] sm:$0xff]
        %v577 = vld [vmem:[%s342 + $0x550] sm:$0xff]
        %v578 = vld [vmem:[%s342 + $0x558] sm:$0xff]
        %v579 = vld [vmem:[%s342 + $0x560] sm:$0xff]
        %v580 = vld [vmem:[%s342 + $0x568] sm:$0xff]
        %v581 = vld [vmem:[%s342 + $0x570] sm:$0xff]
        %v582 = vld [vmem:[%s342 + $0x578] sm:$0xff]
        %v583 = vld [vmem:[%s342 + $0x580] sm:$0xff]
        %v584 = vld [vmem:[%s342 + $0x588] sm:$0xff]
        %v585 = vld [vmem:[%s342 + $0x590] sm:$0xff]
        %v586 = vld [vmem:[%s342 + $0x598] sm:$0xff]
        %v587 = vld [vmem:[%s342 + $0x5a0] sm:$0xff]
        %v588 = vld [vmem:[%s342 + $0x5a8] sm:$0xff]
        %v589 = vld [vmem:[%s342 + $0x5b0] sm:$0xff]
        %v590 = vld [vmem:[%s342 + $0x5b8] sm:$0xff]
        %v591 = vld [vmem:[%s342 + $0x5c0] sm:$0xff]
        %v592 = vld [vmem:[%s342 + $0x5c8] sm:$0xff]
        %v593 = vld [vmem:[%s342 + $0x5d0] sm:$0xff]
        %v594 = vld [vmem:[%s342 + $0x5d8] sm:$0xff]
        %v595 = vld [vmem:[%s342 + $0x5e0] sm:$0xff]
        %v596 = vld [vmem:[%s342 + $0x5e8] sm:$0xff]
        %v597 = vld [vmem:[%s342 + $0x5f0] sm:$0xff]
        %v598 = vld [vmem:[%s342 + $0x5f8] sm:$0xff]
        %v599 = vld [vmem:[%s342 + $0x600] sm:$0xff]
        %v600 = vld [vmem:[%s342 + $0x608] sm:$0xff]
        %v601 = vld [vmem:[%s342 + $0x610] sm:$0xff]
        %v602 = vld [vmem:[%s342 + $0x618] sm:$0xff]
        %v603 = vld [vmem:[%s342 + $0x620] sm:$0xff]
        %v604 = vld [vmem:[%s342 + $0x628] sm:$0xff]
        %v605 = vld [vmem:[%s342 + $0x630] sm:$0xff]
        %v606 = vld [vmem:[%s342 + $0x638] sm:$0xff]
        %v607 = vld [vmem:[%s342 + $0x640] sm:$0xff]
        %v608 = vld [vmem:[%s342 + $0x648] sm:$0xff]
        %v609 = vld [vmem:[%s342 + $0x650] sm:$0xff]
        %v610 = vld [vmem:[%s342 + $0x658] sm:$0xff]
        %v611 = vld [vmem:[%s342 + $0x660] sm:$0xff]
        %v612 = vld [vmem:[%s342 + $0x668] sm:$0xff]
        %v613 = vld [vmem:[%s342 + $0x670] sm:$0xff]
        %v614 = vld [vmem:[%s342 + $0x678] sm:$0xff]
        %v615 = vld [vmem:[%s342 + $0x680] sm:$0xff]
        %v616 = vld [vmem:[%s342 + $0x688] sm:$0xff]
        %v617 = vld [vmem:[%s342 + $0x690] sm:$0xff]
        %v618 = vld [vmem:[%s342 + $0x698] sm:$0xff]
        %v619 = vld [vmem:[%s342 + $0x6a0] sm:$0xff]
        %v620 = vld [vmem:[%s342 + $0x6a8] sm:$0xff]
        %v621 = vld [vmem:[%s342 + $0x6b0] sm:$0xff]
        %v622 = vld [vmem:[%s342 + $0x6b8] sm:$0xff]
        %v623 = vld [vmem:[%s342 + $0x6c0] sm:$0xff]
        %v624 = vld [vmem:[%s342 + $0x6c8] sm:$0xff]
        %v625 = vld [vmem:[%s342 + $0x6d0] sm:$0xff]
        %v626 = vld [vmem:[%s342 + $0x6d8] sm:$0xff]
        %v627 = vld [vmem:[%s342 + $0x6e0] sm:$0xff]
        %v628 = vld [vmem:[%s342 + $0x6e8] sm:$0xff]
        %v629 = vld [vmem:[%s342 + $0x6f0] sm:$0xff]
        %v630 = vld [vmem:[%s342 + $0x6f8] sm:$0xff]
        %v631 = vld [vmem:[%s342 + $0x700] sm:$0xff]
        %v632 = vld [vmem:[%s342 + $0x708] sm:$0xff]
        %v633 = vld [vmem:[%s342 + $0x710] sm:$0xff]
        %v634 = vld [vmem:[%s342 + $0x718] sm:$0xff]
        %v635 = vld [vmem:[%s342 + $0x720] sm:$0xff]
        %v636 = vld [vmem:[%s342 + $0x728] sm:$0xff]
        %v637 = vld [vmem:[%s342 + $0x730] sm:$0xff]
        %v638 = vld [vmem:[%s342 + $0x738] sm:$0xff]
        %v639 = vld [vmem:[%s342 + $0x740] sm:$0xff]
        %v640 = vld [vmem:[%s342 + $0x748] sm:$0xff]
        %v641 = vld [vmem:[%s342 + $0x750] sm:$0xff]
        %v642 = vld [vmem:[%s342 + $0x758] sm:$0xff]
        %v643 = vld [vmem:[%s342 + $0x760] sm:$0xff]
        %v644 = vld [vmem:[%s342 + $0x768] sm:$0xff]
        %v645 = vld [vmem:[%s342 + $0x770] sm:$0xff]
        %v646 = vld [vmem:[%s342 + $0x778] sm:$0xff]
        %v647 = vld [vmem:[%s342 + $0x780] sm:$0xff]
        %v648 = vld [vmem:[%s342 + $0x788] sm:$0xff]
        %v649 = vld [vmem:[%s342 + $0x790] sm:$0xff]
        %v650 = vld [vmem:[%s342 + $0x798] sm:$0xff]
        %v651 = vld [vmem:[%s342 + $0x7a0] sm:$0xff]
        %v652 = vld [vmem:[%s342 + $0x7a8] sm:$0xff]
        %v653 = vld [vmem:[%s342 + $0x7b0] sm:$0xff]
        %v654 = vld [vmem:[%s342 + $0x7b8] sm:$0xff]
        %v655 = vld [vmem:[%s342 + $0x7c0] sm:$0xff]
        %v656 = vld [vmem:[%s342 + $0x7c8] sm:$0xff]
        %v657 = vld [vmem:[%s342 + $0x7d0] sm:$0xff]
        %v658 = vld [vmem:[%s342 + $0x7d8] sm:$0xff]
        %v659 = vld [vmem:[%s342 + $0x7e0] sm:$0xff]
        %v660 = vld [vmem:[%s342 + $0x7e8] sm:$0xff]
        %v661 = vld [vmem:[%s342 + $0x7f0] sm:$0xff]
        %v662 = vld [vmem:[%s342 + $0x7f8] sm:$0xff]
        %v663 = vld [vmem:[%s342 + $0x800] sm:$0xff]
        %v664 = vld [vmem:[%s342 + $0x808] sm:$0xff]
        %v665 = vld [vmem:[%s342 + $0x810] sm:$0xff]
        %v666 = vld [vmem:[%s342 + $0x818] sm:$0xff]
        %v667 = vld [vmem:[%s342 + $0x820] sm:$0xff]
        %v668 = vld [vmem:[%s342 + $0x828] sm:$0xff]
        %v669 = vld [vmem:[%s342 + $0x830] sm:$0xff]
        %v670 = vld [vmem:[%s342 + $0x838] sm:$0xff]
        %v671 = vld [vmem:[%s342 + $0x840] sm:$0xff]
        %v672 = vld [vmem:[%s342 + $0x848] sm:$0xff]
        %v673 = vld [vmem:[%s342 + $0x850] sm:$0xff]
        %v674 = vld [vmem:[%s342 + $0x858] sm:$0xff]
        %v675 = vld [vmem:[%s342 + $0x860] sm:$0xff]
        %v676 = vld [vmem:[%s342 + $0x868] sm:$0xff]
        %v677 = vld [vmem:[%s342 + $0x870] sm:$0xff]
        %v678 = vld [vmem:[%s342 + $0x878] sm:$0xff]
        %v679 = vld [vmem:[%s342 + $0x880] sm:$0xff]
        %v680 = vld [vmem:[%s342 + $0x888] sm:$0xff]
        %v681 = vld [vmem:[%s342 + $0x890] sm:$0xff]
        %v682 = vld [vmem:[%s342 + $0x898] sm:$0xff]
        %v683 = vld [vmem:[%s342 + $0x8a0] sm:$0xff]
        %v684 = vld [vmem:[%s342 + $0x8a8] sm:$0xff]
        %v685 = vld [vmem:[%s342 + $0x8b0] sm:$0xff]
        %v686 = vld [vmem:[%s342 + $0x8b8] sm:$0xff]
        %v687 = vld [vmem:[%s342 + $0x8c0] sm:$0xff]
        %v688 = vld [vmem:[%s342 + $0x8c8] sm:$0xff]
        %v689 = vld [vmem:[%s342 + $0x8d0] sm:$0xff]
        %v690 = vld [vmem:[%s342 + $0x8d8] sm:$0xff]
        %v691 = vld [vmem:[%s342 + $0x8e0] sm:$0xff]
        %v692 = vld [vmem:[%s342 + $0x8e8] sm:$0xff]
        %v693 = vld [vmem:[%s342 + $0x8f0] sm:$0xff]
        %v694 = vld [vmem:[%s342 + $0x8f8] sm:$0xff]
        %v695 = vld [vmem:[%s342 + $0x900] sm:$0xff]
        %v696 = vld [vmem:[%s342 + $0x908] sm:$0xff]
        %v697 = vld [vmem:[%s342 + $0x910] sm:$0xff]
        %v698 = vld [vmem:[%s342 + $0x918] sm:$0xff]
        %v699 = vld [vmem:[%s342 + $0x920] sm:$0xff]
        %v700 = vld [vmem:[%s342 + $0x928] sm:$0xff]
        %v701 = vld [vmem:[%s342 + $0x930] sm:$0xff]
        %v702 = vld [vmem:[%s342 + $0x938] sm:$0xff]
        %v703 = vld [vmem:[%s342 + $0x940] sm:$0xff]
        %v704 = vld [vmem:[%s342 + $0x948] sm:$0xff]
        %v705 = vld [vmem:[%s342 + $0x950] sm:$0xff]
        %v706 = vld [vmem:[%s342 + $0x958] sm:$0xff]
        %v707 = vld [vmem:[%s342 + $0x960] sm:$0xff]
        %v708 = vld [vmem:[%s342 + $0x968] sm:$0xff]
        %v709 = vld [vmem:[%s342 + $0x970] sm:$0xff]
        %v710 = vld [vmem:[%s342 + $0x978] sm:$0xff]
        %v711 = vld [vmem:[%s342 + $0x980] sm:$0xff]
        %v712 = vld [vmem:[%s342 + $0x988] sm:$0xff]
        %v713 = vld [vmem:[%s342 + $0x990] sm:$0xff]
        %v714 = vld [vmem:[%s342 + $0x998] sm:$0xff]
        %v715 = vld [vmem:[%s342 + $0x9a0] sm:$0xff]
        %v716 = vld [vmem:[%s342 + $0x9a8] sm:$0xff]
        %v717 = vld [vmem:[%s342 + $0x9b0] sm:$0xff]
        %v718 = vld [vmem:[%s342 + $0x9b8] sm:$0xff]
        %v719 = vld [vmem:[%s342 + $0x9c0] sm:$0xff]
        %v720 = vld [vmem:[%s342 + $0x9c8] sm:$0xff]
        %v721 = vld [vmem:[%s342 + $0x9d0] sm:$0xff]
        %v722 = vld [vmem:[%s342 + $0x9d8] sm:$0xff]
        %v723 = vld [vmem:[%s342 + $0x9e0] sm:$0xff]
        %v724 = vld [vmem:[%s342 + $0x9e8] sm:$0xff]
        %v725 = vld [vmem:[%s342 + $0x9f0] sm:$0xff]
        %v726 = vld [vmem:[%s342 + $0x9f8] sm:$0xff]
        %v727 = vld [vmem:[%s342 + $0xa00] sm:$0xff]
        %v728 = vld [vmem:[%s342 + $0xa08] sm:$0xff]
        %v729 = vld [vmem:[%s342 + $0xa10] sm:$0xff]
        %v730 = vld [vmem:[%s342 + $0xa18] sm:$0xff]
        %v731 = vld [vmem:[%s342 + $0xa20] sm:$0xff]
        %v732 = vld [vmem:[%s342 + $0xa28] sm:$0xff]
        %v733 = vld [vmem:[%s342 + $0xa30] sm:$0xff]
        %v734 = vld [vmem:[%s342 + $0xa38] sm:$0xff]
        %v735 = vld [vmem:[%s342 + $0xa40] sm:$0xff]
        %v736 = vld [vmem:[%s342 + $0xa48] sm:$0xff]
        %v737 = vld [vmem:[%s342 + $0xa50] sm:$0xff]
        %v738 = vld [vmem:[%s342 + $0xa58] sm:$0xff]
        %v739 = vld [vmem:[%s342 + $0xa60] sm:$0xff]
        %v740 = vld [vmem:[%s342 + $0xa68] sm:$0xff]
        %v741 = vld [vmem:[%s342 + $0xa70] sm:$0xff]
        %v742 = vld [vmem:[%s342 + $0xa78] sm:$0xff]
        %v743 = vld [vmem:[%s342 + $0xa80] sm:$0xff]
        %v744 = vld [vmem:[%s342 + $0xa88] sm:$0xff]
        %v745 = vld [vmem:[%s342 + $0xa90] sm:$0xff]
        %v746 = vld [vmem:[%s342 + $0xa98] sm:$0xff]
        %v747 = vld [vmem:[%s342 + $0xaa0] sm:$0xff]
        %v748 = vld [vmem:[%s342 + $0xaa8] sm:$0xff]
        %v749 = vld [vmem:[%s342 + $0xab0] sm:$0xff]
        %v750 = vld [vmem:[%s342 + $0xab8] sm:$0xff]
        %v751 = vld [vmem:[%s342 + $0xac0] sm:$0xff]
        %v752 = vld [vmem:[%s342 + $0xac8] sm:$0xff]
        %v753 = vld [vmem:[%s342 + $0xad0] sm:$0xff]
        %v754 = vld [vmem:[%s342 + $0xad8] sm:$0xff]
        %v755 = vld [vmem:[%s342 + $0xae0] sm:$0xff]
        %v756 = vld [vmem:[%s342 + $0xae8] sm:$0xff]
        %v757 = vld [vmem:[%s342 + $0xaf0] sm:$0xff]
        %v758 = vld [vmem:[%s342 + $0xaf8] sm:$0xff]
        %v759 = vld [vmem:[%s342 + $0xb00] sm:$0xff]
        %v760 = vld [vmem:[%s342 + $0xb08] sm:$0xff]
        %v761 = vld [vmem:[%s342 + $0xb10] sm:$0xff]
        %v762 = vld [vmem:[%s342 + $0xb18] sm:$0xff]
        %v763 = vld [vmem:[%s342 + $0xb20] sm:$0xff]
        %v764 = vld [vmem:[%s342 + $0xb28] sm:$0xff]
        %v765 = vld [vmem:[%s342 + $0xb30] sm:$0xff]
        %v766 = vld [vmem:[%s342 + $0xb38] sm:$0xff]
        %v767 = vld [vmem:[%s342 + $0xb40] sm:$0xff]
        %v768 = vld [vmem:[%s342 + $0xb48] sm:$0xff]
        %v769 = vld [vmem:[%s342 + $0xb50] sm:$0xff]
        %v770 = vld [vmem:[%s342 + $0xb58] sm:$0xff]
        %v771 = vld [vmem:[%s342 + $0xb60] sm:$0xff]
        %v772 = vld [vmem:[%s342 + $0xb68] sm:$0xff]
        %v773 = vld [vmem:[%s342 + $0xb70] sm:$0xff]
        %v774 = vld [vmem:[%s342 + $0xb78] sm:$0xff]
        %v775 = vld [vmem:[%s342 + $0xb80] sm:$0xff]
        %v776 = vld [vmem:[%s342 + $0xb88] sm:$0xff]
        %v777 = vld [vmem:[%s342 + $0xb90] sm:$0xff]
        %v778 = vld [vmem:[%s342 + $0xb98] sm:$0xff]
        %v779 = vld [vmem:[%s342 + $0xba0] sm:$0xff]
        %v780 = vld [vmem:[%s342 + $0xba8] sm:$0xff]
        %v781 = vld [vmem:[%s342 + $0xbb0] sm:$0xff]
        %v782 = vld [vmem:[%s342 + $0xbb8] sm:$0xff]
        %v783 = vld [vmem:[%s342 + $0xbc0] sm:$0xff]
        %v784 = vld [vmem:[%s342 + $0xbc8] sm:$0xff]
        %v785 = vld [vmem:[%s342 + $0xbd0] sm:$0xff]
        %v786 = vld [vmem:[%s342 + $0xbd8] sm:$0xff]
        %v787 = vld [vmem:[%s342 + $0xbe0] sm:$0xff]
        %v788 = vld [vmem:[%s342 + $0xbe8] sm:$0xff]
        %v789 = vld [vmem:[%s342 + $0xbf0] sm:$0xff]
        %v790 = vld [vmem:[%s342 + $0xbf8] sm:$0xff]
        %v791 = vld [vmem:[%s342 + $0xc00] sm:$0xff]
        %v792 = vld [vmem:[%s342 + $0xc08] sm:$0xff]
        %v793 = vld [vmem:[%s342 + $0xc10] sm:$0xff]
        %v794 = vld [vmem:[%s342 + $0xc18] sm:$0xff]
        %v795 = vld [vmem:[%s342 + $0xc20] sm:$0xff]
        %v796 = vld [vmem:[%s342 + $0xc28] sm:$0xff]
        %v797 = vld [vmem:[%s342 + $0xc30] sm:$0xff]
        %v798 = vld [vmem:[%s342 + $0xc38] sm:$0xff]
        %v799 = vld [vmem:[%s342 + $0xc40] sm:$0xff]
        %v800 = vld [vmem:[%s342 + $0xc48] sm:$0xff]
        %v801 = vld [vmem:[%s342 + $0xc50] sm:$0xff]
        %v802 = vld [vmem:[%s342 + $0xc58] sm:$0xff]
        %v803 = vld [vmem:[%s342 + $0xc60] sm:$0xff]
        %v804 = vld [vmem:[%s342 + $0xc68] sm:$0xff]
        %v805 = vld [vmem:[%s342 + $0xc70] sm:$0xff]
        %v806 = vld [vmem:[%s342 + $0xc78] sm:$0xff]
        %v807 = vld [vmem:[%s342 + $0xc80] sm:$0xff]
        %v808 = vld [vmem:[%s342 + $0xc88] sm:$0xff]
        %v809 = vld [vmem:[%s342 + $0xc90] sm:$0xff]
        %v810 = vld [vmem:[%s342 + $0xc98] sm:$0xff]
        %v811 = vld [vmem:[%s342 + $0xca0] sm:$0xff]
        %v812 = vld [vmem:[%s342 + $0xca8] sm:$0xff]
        %v813 = vld [vmem:[%s342 + $0xcb0] sm:$0xff]
        %v814 = vld [vmem:[%s342 + $0xcb8] sm:$0xff]
        %v815 = vld [vmem:[%s342 + $0xcc0] sm:$0xff]
        %v816 = vld [vmem:[%s342 + $0xcc8] sm:$0xff]
        %v817 = vld [vmem:[%s342 + $0xcd0] sm:$0xff]
        %v818 = vld [vmem:[%s342 + $0xcd8] sm:$0xff]
        %v819 = vld [vmem:[%s342 + $0xce0] sm:$0xff]
        %v820 = vld [vmem:[%s342 + $0xce8] sm:$0xff]
        %v821 = vld [vmem:[%s342 + $0xcf0] sm:$0xff]
        %v822 = vld [vmem:[%s342 + $0xcf8] sm:$0xff]
        %v823 = vld [vmem:[%s342 + $0xd00] sm:$0xff]
        %v824 = vld [vmem:[%s342 + $0xd08] sm:$0xff]
        %v825 = vld [vmem:[%s342 + $0xd10] sm:$0xff]
        %v826 = vld [vmem:[%s342 + $0xd18] sm:$0xff]
        %v827 = vld [vmem:[%s342 + $0xd20] sm:$0xff]
        %v828 = vld [vmem:[%s342 + $0xd28] sm:$0xff]
        %v829 = vld [vmem:[%s342 + $0xd30] sm:$0xff]
        %v830 = vld [vmem:[%s342 + $0xd38] sm:$0xff]
        %v831 = vld [vmem:[%s342 + $0xd40] sm:$0xff]
        %v832 = vld [vmem:[%s342 + $0xd48] sm:$0xff]
        %v833 = vld [vmem:[%s342 + $0xd50] sm:$0xff]
        %v834 = vld [vmem:[%s342 + $0xd58] sm:$0xff]
        %v835 = vld [vmem:[%s342 + $0xd60] sm:$0xff]
        %v836 = vld [vmem:[%s342 + $0xd68] sm:$0xff]
        %v837 = vld [vmem:[%s342 + $0xd70] sm:$0xff]
        %v838 = vld [vmem:[%s342 + $0xd78] sm:$0xff]
        %v839 = vld [vmem:[%s342 + $0xd80] sm:$0xff]
        %v840 = vld [vmem:[%s342 + $0xd88] sm:$0xff]
        %v841 = vld [vmem:[%s342 + $0xd90] sm:$0xff]
        %v842 = vld [vmem:[%s342 + $0xd98] sm:$0xff]
        %v843 = vld [vmem:[%s342 + $0xda0] sm:$0xff]
        %v844 = vld [vmem:[%s342 + $0xda8] sm:$0xff]
        %v845 = vld [vmem:[%s342 + $0xdb0] sm:$0xff]
        %v846 = vld [vmem:[%s342 + $0xdb8] sm:$0xff]
        %v847 = vld [vmem:[%s342 + $0xdc0] sm:$0xff]
        %v848 = vld [vmem:[%s342 + $0xdc8] sm:$0xff]
        %v849 = vld [vmem:[%s342 + $0xdd0] sm:$0xff]
        %v850 = vld [vmem:[%s342 + $0xdd8] sm:$0xff]
        %v851 = vld [vmem:[%s342 + $0xde0] sm:$0xff]
        %v852 = vld [vmem:[%s342 + $0xde8] sm:$0xff]
        %v853 = vld [vmem:[%s342 + $0xdf0] sm:$0xff]
        %v854 = vld [vmem:[%s342 + $0xdf8] sm:$0xff]
        %v855 = vld [vmem:[%s342 + $0xe00] sm:$0xff]
        %v856 = vld [vmem:[%s342 + $0xe08] sm:$0xff]
        %v857 = vld [vmem:[%s342 + $0xe10] sm:$0xff]
        %v858 = vld [vmem:[%s342 + $0xe18] sm:$0xff]
        %v859 = vld [vmem:[%s342 + $0xe20] sm:$0xff]
        %v860 = vld [vmem:[%s342 + $0xe28] sm:$0xff]
        %v861 = vld [vmem:[%s342 + $0xe30] sm:$0xff]
        %v862 = vld [vmem:[%s342 + $0xe38] sm:$0xff]
        %v863 = vld [vmem:[%s342 + $0xe40] sm:$0xff]
        %v864 = vld [vmem:[%s342 + $0xe48] sm:$0xff]
        %v865 = vld [vmem:[%s342 + $0xe50] sm:$0xff]
        %v866 = vld [vmem:[%s342 + $0xe58] sm:$0xff]
        %v867 = vld [vmem:[%s342 + $0xe60] sm:$0xff]
        %v868 = vld [vmem:[%s342 + $0xe68] sm:$0xff]
        %v869 = vld [vmem:[%s342 + $0xe70] sm:$0xff]
        %v870 = vld [vmem:[%s342 + $0xe78] sm:$0xff]
        %v871 = vld [vmem:[%s342 + $0xe80] sm:$0xff]
        %v872 = vld [vmem:[%s342 + $0xe88] sm:$0xff]
        %v873 = vld [vmem:[%s342 + $0xe90] sm:$0xff]
        %v874 = vld [vmem:[%s342 + $0xe98] sm:$0xff]
        %v875 = vld [vmem:[%s342 + $0xea0] sm:$0xff]
        %v876 = vld [vmem:[%s342 + $0xea8] sm:$0xff]
        %v877 = vld [vmem:[%s342 + $0xeb0] sm:$0xff]
        %v878 = vld [vmem:[%s342 + $0xeb8] sm:$0xff]
        %v879 = vld [vmem:[%s342 + $0xec0] sm:$0xff]
        %v880 = vld [vmem:[%s342 + $0xec8] sm:$0xff]
        %v881 = vld [vmem:[%s342 + $0xed0] sm:$0xff]
        %v882 = vld [vmem:[%s342 + $0xed8] sm:$0xff]
        %v883 = vld [vmem:[%s342 + $0xee0] sm:$0xff]
        %v884 = vld [vmem:[%s342 + $0xee8] sm:$0xff]
        %v885 = vld [vmem:[%s342 + $0xef0] sm:$0xff]
        %v886 = vld [vmem:[%s342 + $0xef8] sm:$0xff]
        %v887 = vld [vmem:[%s342 + $0xf00] sm:$0xff]
        %v888 = vld [vmem:[%s342 + $0xf08] sm:$0xff]
        %v889 = vld [vmem:[%s342 + $0xf10] sm:$0xff]
        %v890 = vld [vmem:[%s342 + $0xf18] sm:$0xff]
        %v891 = vld [vmem:[%s342 + $0xf20] sm:$0xff]
        %v892 = vld [vmem:[%s342 + $0xf28] sm:$0xff]
        %v893 = vld [vmem:[%s342 + $0xf30] sm:$0xff]
        %v894 = vld [vmem:[%s342 + $0xf38] sm:$0xff]
        %v895 = vld [vmem:[%s342 + $0xf40] sm:$0xff]
        %v896 = vld [vmem:[%s342 + $0xf48] sm:$0xff]
        %v897 = vld [vmem:[%s342 + $0xf50] sm:$0xff]
        %v898 = vld [vmem:[%s342 + $0xf58] sm:$0xff]
        %v899 = vld [vmem:[%s342 + $0xf60] sm:$0xff]
        %v900 = vld [vmem:[%s342 + $0xf68] sm:$0xff]
        %v901 = vld [vmem:[%s342 + $0xf70] sm:$0xff]
        %v902 = vld [vmem:[%s342 + $0xf78] sm:$0xff]
        %v903 = vld [vmem:[%s342 + $0xf80] sm:$0xff]
        %v904 = vld [vmem:[%s342 + $0xf88] sm:$0xff]
        %v905 = vld [vmem:[%s342 + $0xf90] sm:$0xff]
        %v906 = vld [vmem:[%s342 + $0xf98] sm:$0xff]
        %v907 = vld [vmem:[%s342 + $0xfa0] sm:$0xff]
        %v908 = vld [vmem:[%s342 + $0xfa8] sm:$0xff]
        %v909 = vld [vmem:[%s342 + $0xfb0] sm:$0xff]
        %v910 = vld [vmem:[%s342 + $0xfb8] sm:$0xff]
        %v911 = vld [vmem:[%s342 + $0xfc0] sm:$0xff]
        %v912 = vld [vmem:[%s342 + $0xfc8] sm:$0xff]
        %v913 = vld [vmem:[%s342 + $0xfd0] sm:$0xff]
        %v914 = vld [vmem:[%s342 + $0xfd8] sm:$0xff]
        %v915 = vld [vmem:[%s342 + $0xfe0] sm:$0xff]
        %v916 = vld [vmem:[%s342 + $0xfe8] sm:$0xff]
        %v917 = vld [vmem:[%s342 + $0xff0] sm:$0xff]
        %v918 = vld [vmem:[%s342 + $0xff8] sm:$0xff]
        %v923 = vcombine.high %v403, %v403
        %v924 = vcombine.high %v404, %v404
        %v925 = vcombine.high %v405, %v405
        %v926 = vcombine.high %v406, %v406
        %931 = vmatprep.subr.mxu0 %v408
        %932 = vmatpush1.msra.mxu0 %v407
        %933 = vmatprep.subr.mxu0 %v412
        %934 = vmatpush1.msra.mxu0 %v411
        %935 = vmatprep.subr.mxu0 %v416
        %936 = vmatpush1.msra.mxu0 %v415
        %937 = vmatprep.subr.mxu0 %v420
        %938 = vmatpush1.msra.mxu0 %v419
        %939 = vmatprep.subr.mxu0 %v424
        %940 = vmatpush1.msra.mxu0 %v423
        %941 = vmatprep.subr.mxu0 %v428
        %942 = vmatpush1.msra.mxu0 %v427
        %943 = vmatprep.subr.mxu0 %v432
        %944 = vmatpush1.msra.mxu0 %v431
        %945 = vmatprep.subr.mxu0 %v436
        %946 = vmatpush1.msra.mxu0 %v435
        %947 = vmatprep.subr.mxu0 %v440
        %948 = vmatpush1.msra.mxu0 %v439
        %949 = vmatprep.subr.mxu0 %v444
        %950 = vmatpush1.msra.mxu0 %v443
        %951 = vmatprep.subr.mxu0 %v448
        %952 = vmatpush1.msra.mxu0 %v447
        %953 = vmatprep.subr.mxu0 %v452
        %954 = vmatpush1.msra.mxu0 %v451
        %955 = vmatprep.subr.mxu0 %v456
        %956 = vmatpush1.msra.mxu0 %v455
        %957 = vmatprep.subr.mxu0 %v460
        %958 = vmatpush1.msra.mxu0 %v459
        %959 = vmatprep.subr.mxu0 %v464
        %960 = vmatpush1.msra.mxu0 %v463
        %961 = vmatprep.subr.mxu0 %v468
        %962 = vmatpush1.msra.mxu0 %v467
        %963 = vmatprep.subr.mxu0 %v472
        %964 = vmatpush1.msra.mxu0 %v471
        %965 = vmatprep.subr.mxu0 %v476
        %966 = vmatpush1.msra.mxu0 %v475
        %967 = vmatprep.subr.mxu0 %v480
        %968 = vmatpush1.msra.mxu0 %v479
        %969 = vmatprep.subr.mxu0 %v484
        %970 = vmatpush1.msra.mxu0 %v483
        %971 = vmatprep.subr.mxu0 %v488
        %972 = vmatpush1.msra.mxu0 %v487
        %973 = vmatprep.subr.mxu0 %v492
        %974 = vmatpush1.msra.mxu0 %v491
        %975 = vmatprep.subr.mxu0 %v496
        %976 = vmatpush1.msra.mxu0 %v495
        %977 = vmatprep.subr.mxu0 %v500
        %978 = vmatpush1.msra.mxu0 %v499
        %979 = vmatprep.subr.mxu0 %v504
        %980 = vmatpush1.msra.mxu0 %v503
        %981 = vmatprep.subr.mxu0 %v508
        %982 = vmatpush1.msra.mxu0 %v507
        %983 = vmatprep.subr.mxu0 %v512
        %984 = vmatpush1.msra.mxu0 %v511
        %985 = vmatprep.subr.mxu0 %v516
        %986 = vmatpush1.msra.mxu0 %v515
        %987 = vmatprep.subr.mxu0 %v520
        %988 = vmatpush1.msra.mxu0 %v519
        %989 = vmatprep.subr.mxu0 %v524
        %990 = vmatpush1.msra.mxu0 %v523
        %991 = vmatprep.subr.mxu0 %v528
        %992 = vmatpush1.msra.mxu0 %v527
        %993 = vmatprep.subr.mxu0 %v532
        %994 = vmatpush1.msra.mxu0 %v531
        %995 = vmatprep.mubr.f32.mxu0 %v923
        %996 = vmatmul.mubr.f32.gmra.mrb[0].mxu0 %v403
        %v997 = vpop.f32.mrb[0].mxu0
        %v998 = vadd.f32 0.0, %v997
        %v999 = vpop.f32.mrb[0].mxu0
        %v1000 = vadd.f32 0.0, %v999
        %1001 = vdwg.mxu0
        %1002 = vmatprep.subr.mxu0 %v536
        %1003 = vmatpush1.msra.mxu0 %v535
        %1004 = vmatprep.subr.mxu0 %v540
        %1005 = vmatpush1.msra.mxu0 %v539
        %1006 = vmatprep.subr.mxu0 %v544
        %1007 = vmatpush1.msra.mxu0 %v543
        %1008 = vmatprep.subr.mxu0 %v548
        %1009 = vmatpush1.msra.mxu0 %v547
        %1010 = vmatprep.subr.mxu0 %v552
        %1011 = vmatpush1.msra.mxu0 %v551
        %1012 = vmatprep.subr.mxu0 %v556
        %1013 = vmatpush1.msra.mxu0 %v555
        %1014 = vmatprep.subr.mxu0 %v560
        %1015 = vmatpush1.msra.mxu0 %v559
        %1016 = vmatprep.subr.mxu0 %v564
        %1017 = vmatpush1.msra.mxu0 %v563
        %1018 = vmatprep.subr.mxu0 %v568
        %1019 = vmatpush1.msra.mxu0 %v567
        %1020 = vmatprep.subr.mxu0 %v572
        %1021 = vmatpush1.msra.mxu0 %v571
        %1022 = vmatprep.subr.mxu0 %v576
        %1023 = vmatpush1.msra.mxu0 %v575
        %1024 = vmatprep.subr.mxu0 %v580
        %1025 = vmatpush1.msra.mxu0 %v579
        %1026 = vmatprep.subr.mxu0 %v584
        %1027 = vmatpush1.msra.mxu0 %v583
        %1028 = vmatprep.subr.mxu0 %v588
        %1029 = vmatpush1.msra.mxu0 %v587
        %1030 = vmatprep.subr.mxu0 %v592
        %1031 = vmatpush1.msra.mxu0 %v591
        %1032 = vmatprep.subr.mxu0 %v596
        %1033 = vmatpush1.msra.mxu0 %v595
        %1034 = vmatprep.subr.mxu0 %v600
        %1035 = vmatpush1.msra.mxu0 %v599
        %1036 = vmatprep.subr.mxu0 %v604
        %1037 = vmatpush1.msra.mxu0 %v603
        %1038 = vmatprep.subr.mxu0 %v608
        %1039 = vmatpush1.msra.mxu0 %v607
        %1040 = vmatprep.subr.mxu0 %v612
        %1041 = vmatpush1.msra.mxu0 %v611
        %1042 = vmatprep.subr.mxu0 %v616
        %1043 = vmatpush1.msra.mxu0 %v615
        %1044 = vmatprep.subr.mxu0 %v620
        %1045 = vmatpush1.msra.mxu0 %v619
        %1046 = vmatprep.subr.mxu0 %v624
        %1047 = vmatpush1.msra.mxu0 %v623
        %1048 = vmatprep.subr.mxu0 %v628
        %1049 = vmatpush1.msra.mxu0 %v627
        %1050 = vmatprep.subr.mxu0 %v632
        %1051 = vmatpush1.msra.mxu0 %v631
        %1052 = vmatprep.subr.mxu0 %v636
        %1053 = vmatpush1.msra.mxu0 %v635
        %1054 = vmatprep.subr.mxu0 %v640
        %1055 = vmatpush1.msra.mxu0 %v639
        %1056 = vmatprep.subr.mxu0 %v644
        %1057 = vmatpush1.msra.mxu0 %v643
        %1058 = vmatprep.subr.mxu0 %v648
        %1059 = vmatpush1.msra.mxu0 %v647
        %1060 = vmatprep.subr.mxu0 %v652
        %1061 = vmatpush1.msra.mxu0 %v651
        %1062 = vmatprep.subr.mxu0 %v656
        %1063 = vmatpush1.msra.mxu0 %v655
        %1064 = vmatprep.subr.mxu0 %v660
        %1065 = vmatpush1.msra.mxu0 %v659
        %1066 = vmatprep.mubr.f32.mxu0 %v924
        %1067 = vmatmul.mubr.f32.gmra.mrb[0].mxu0 %v404
        %v1068 = vpop.f32.mrb[0].mxu0
        %v1069 = vadd.f32 %v998, %v1068
        %v1070 = vpop.f32.mrb[0].mxu0
        %v1071 = vadd.f32 %v1000, %v1070
        %1072 = vdwg.mxu0
        %1073 = vmatprep.subr.mxu0 %v664
        %1074 = vmatpush1.msra.mxu0 %v663
        %1075 = vmatprep.subr.mxu0 %v668
        %1076 = vmatpush1.msra.mxu0 %v667
        %1077 = vmatprep.subr.mxu0 %v672
        %1078 = vmatpush1.msra.mxu0 %v671
        %1079 = vmatprep.subr.mxu0 %v676
        %1080 = vmatpush1.msra.mxu0 %v675
        %1081 = vmatprep.subr.mxu0 %v680
        %1082 = vmatpush1.msra.mxu0 %v679
        %1083 = vmatprep.subr.mxu0 %v684
        %1084 = vmatpush1.msra.mxu0 %v683
        %1085 = vmatprep.subr.mxu0 %v688
        %1086 = vmatpush1.msra.mxu0 %v687
        %1087 = vmatprep.subr.mxu0 %v692
        %1088 = vmatpush1.msra.mxu0 %v691
        %1089 = vmatprep.subr.mxu0 %v696
        %1090 = vmatpush1.msra.mxu0 %v695
        %1091 = vmatprep.subr.mxu0 %v700
        %1092 = vmatpush1.msra.mxu0 %v699
        %1093 = vmatprep.subr.mxu0 %v704
        %1094 = vmatpush1.msra.mxu0 %v703
        %1095 = vmatprep.subr.mxu0 %v708
        %1096 = vmatpush1.msra.mxu0 %v707
        %1097 = vmatprep.subr.mxu0 %v712
        %1098 = vmatpush1.msra.mxu0 %v711
        %1099 = vmatprep.subr.mxu0 %v716
        %1100 = vmatpush1.msra.mxu0 %v715
        %1101 = vmatprep.subr.mxu0 %v720
        %1102 = vmatpush1.msra.mxu0 %v719
        %1103 = vmatprep.subr.mxu0 %v724
        %1104 = vmatpush1.msra.mxu0 %v723
        %1105 = vmatprep.subr.mxu0 %v728
        %1106 = vmatpush1.msra.mxu0 %v727
        %1107 = vmatprep.subr.mxu0 %v732
        %1108 = vmatpush1.msra.mxu0 %v731
        %1109 = vmatprep.subr.mxu0 %v736
        %1110 = vmatpush1.msra.mxu0 %v735
        %1111 = vmatprep.subr.mxu0 %v740
        %1112 = vmatpush1.msra.mxu0 %v739
        %1113 = vmatprep.subr.mxu0 %v744
        %1114 = vmatpush1.msra.mxu0 %v743
        %1115 = vmatprep.subr.mxu0 %v748
        %1116 = vmatpush1.msra.mxu0 %v747
        %1117 = vmatprep.subr.mxu0 %v752
        %1118 = vmatpush1.msra.mxu0 %v751
        %1119 = vmatprep.subr.mxu0 %v756
        %1120 = vmatpush1.msra.mxu0 %v755
        %1121 = vmatprep.subr.mxu0 %v760
        %1122 = vmatpush1.msra.mxu0 %v759
        %1123 = vmatprep.subr.mxu0 %v764
        %1124 = vmatpush1.msra.mxu0 %v763
        %1125 = vmatprep.subr.mxu0 %v768
        %1126 = vmatpush1.msra.mxu0 %v767
        %1127 = vmatprep.subr.mxu0 %v772
        %1128 = vmatpush1.msra.mxu0 %v771
        %1129 = vmatprep.subr.mxu0 %v776
        %1130 = vmatpush1.msra.mxu0 %v775
        %1131 = vmatprep.subr.mxu0 %v780
        %1132 = vmatpush1.msra.mxu0 %v779
        %1133 = vmatprep.subr.mxu0 %v784
        %1134 = vmatpush1.msra.mxu0 %v783
        %1135 = vmatprep.subr.mxu0 %v788
        %1136 = vmatpush1.msra.mxu0 %v787
        %1137 = vmatprep.mubr.f32.mxu0 %v925
        %1138 = vmatmul.mubr.f32.gmra.mrb[0].mxu0 %v405
        %v1139 = vpop.f32.mrb[0].mxu0
        %v1140 = vadd.f32 %v1069, %v1139
        %v1141 = vpop.f32.mrb[0].mxu0
        %v1142 = vadd.f32 %v1071, %v1141
        %1143 = vdwg.mxu0
        %1144 = vmatprep.subr.mxu0 %v792
        %1145 = vmatpush1.msra.mxu0 %v791
        %1146 = vmatprep.subr.mxu0 %v796
        %1147 = vmatpush1.msra.mxu0 %v795
        %1148 = vmatprep.subr.mxu0 %v800
        %1149 = vmatpush1.msra.mxu0 %v799
        %1150 = vmatprep.subr.mxu0 %v804
        %1151 = vmatpush1.msra.mxu0 %v803
        %1152 = vmatprep.subr.mxu0 %v808
        %1153 = vmatpush1.msra.mxu0 %v807
        %1154 = vmatprep.subr.mxu0 %v812
        %1155 = vmatpush1.msra.mxu0 %v811
        %1156 = vmatprep.subr.mxu0 %v816
        %1157 = vmatpush1.msra.mxu0 %v815
        %1158 = vmatprep.subr.mxu0 %v820
        %1159 = vmatpush1.msra.mxu0 %v819
        %1160 = vmatprep.subr.mxu0 %v824
        %1161 = vmatpush1.msra.mxu0 %v823
        %1162 = vmatprep.subr.mxu0 %v828
        %1163 = vmatpush1.msra.mxu0 %v827
        %1164 = vmatprep.subr.mxu0 %v832
        %1165 = vmatpush1.msra.mxu0 %v831
        %1166 = vmatprep.subr.mxu0 %v836
        %1167 = vmatpush1.msra.mxu0 %v835
        %1168 = vmatprep.subr.mxu0 %v840
        %1169 = vmatpush1.msra.mxu0 %v839
        %1170 = vmatprep.subr.mxu0 %v844
        %1171 = vmatpush1.msra.mxu0 %v843
        %1172 = vmatprep.subr.mxu0 %v848
        %1173 = vmatpush1.msra.mxu0 %v847
        %1174 = vmatprep.subr.mxu0 %v852
        %1175 = vmatpush1.msra.mxu0 %v851
        %1176 = vmatprep.subr.mxu0 %v856
        %1177 = vmatpush1.msra.mxu0 %v855
        %1178 = vmatprep.subr.mxu0 %v860
        %1179 = vmatpush1.msra.mxu0 %v859
        %1180 = vmatprep.subr.mxu0 %v864
        %1181 = vmatpush1.msra.mxu0 %v863
        %1182 = vmatprep.subr.mxu0 %v868
        %1183 = vmatpush1.msra.mxu0 %v867
        %1184 = vmatprep.subr.mxu0 %v872
        %1185 = vmatpush1.msra.mxu0 %v871
        %1186 = vmatprep.subr.mxu0 %v876
        %1187 = vmatpush1.msra.mxu0 %v875
        %1188 = vmatprep.subr.mxu0 %v880
        %1189 = vmatpush1.msra.mxu0 %v879
        %1190 = vmatprep.subr.mxu0 %v884
        %1191 = vmatpush1.msra.mxu0 %v883
        %1192 = vmatprep.subr.mxu0 %v888
        %1193 = vmatpush1.msra.mxu0 %v887
        %1194 = vmatprep.subr.mxu0 %v892
        %1195 = vmatpush1.msra.mxu0 %v891
        %1196 = vmatprep.subr.mxu0 %v896
        %1197 = vmatpush1.msra.mxu0 %v895
        %1198 = vmatprep.subr.mxu0 %v900
        %1199 = vmatpush1.msra.mxu0 %v899
        %1200 = vmatprep.subr.mxu0 %v904
        %1201 = vmatpush1.msra.mxu0 %v903
        %1202 = vmatprep.subr.mxu0 %v908
        %1203 = vmatpush1.msra.mxu0 %v907
        %1204 = vmatprep.subr.mxu0 %v912
        %1205 = vmatpush1.msra.mxu0 %v911
        %1206 = vmatprep.subr.mxu0 %v916
        %1207 = vmatpush1.msra.mxu0 %v915
        %1208 = vmatprep.mubr.f32.mxu0 %v926
        %1209 = vmatmul.mubr.f32.gmra.mrb[0].mxu0 %v406
        %v1210 = vpop.f32.mrb[0].mxu0
        %v1211 = vadd.f32 %v1140, %v1210
        %v1212 = vpop.f32.mrb[0].mxu0
        %v1213 = vadd.f32 %v1142, %v1212
        %1214 = vdwg.mxu0
        %1215 = vmatprep.subr.mxu0 %v410
        %1216 = vmatpush1.msra.mxu0 %v409
        %1217 = vmatprep.subr.mxu0 %v414
        %1218 = vmatpush1.msra.mxu0 %v413
        %1219 = vmatprep.subr.mxu0 %v418
        %1220 = vmatpush1.msra.mxu0 %v417
        %1221 = vmatprep.subr.mxu0 %v422
        %1222 = vmatpush1.msra.mxu0 %v421
        %1223 = vmatprep.subr.mxu0 %v426
        %1224 = vmatpush1.msra.mxu0 %v425
        %1225 = vmatprep.subr.mxu0 %v430
        %1226 = vmatpush1.msra.mxu0 %v429
        %1227 = vmatprep.subr.mxu0 %v434
        %1228 = vmatpush1.msra.mxu0 %v433
        %1229 = vmatprep.subr.mxu0 %v438
        %1230 = vmatpush1.msra.mxu0 %v437
        %1231 = vmatprep.subr.mxu0 %v442
        %1232 = vmatpush1.msra.mxu0 %v441
        %1233 = vmatprep.subr.mxu0 %v446
        %1234 = vmatpush1.msra.mxu0 %v445
        %1235 = vmatprep.subr.mxu0 %v450
        %1236 = vmatpush1.msra.mxu0 %v449
        %1237 = vmatprep.subr.mxu0 %v454
        %1238 = vmatpush1.msra.mxu0 %v453
        %1239 = vmatprep.subr.mxu0 %v458
        %1240 = vmatpush1.msra.mxu0 %v457
        %1241 = vmatprep.subr.mxu0 %v462
        %1242 = vmatpush1.msra.mxu0 %v461
        %1243 = vmatprep.subr.mxu0 %v466
        %1244 = vmatpush1.msra.mxu0 %v465
        %1245 = vmatprep.subr.mxu0 %v470
        %1246 = vmatpush1.msra.mxu0 %v469
        %1247 = vmatprep.subr.mxu0 %v474
        %1248 = vmatpush1.msra.mxu0 %v473
        %1249 = vmatprep.subr.mxu0 %v478
        %1250 = vmatpush1.msra.mxu0 %v477
        %1251 = vmatprep.subr.mxu0 %v482
        %1252 = vmatpush1.msra.mxu0 %v481
        %1253 = vmatprep.subr.mxu0 %v486
        %1254 = vmatpush1.msra.mxu0 %v485
        %1255 = vmatprep.subr.mxu0 %v490
        %1256 = vmatpush1.msra.mxu0 %v489
        %1257 = vmatprep.subr.mxu0 %v494
        %1258 = vmatpush1.msra.mxu0 %v493
        %1259 = vmatprep.subr.mxu0 %v498
        %1260 = vmatpush1.msra.mxu0 %v497
        %1261 = vmatprep.subr.mxu0 %v502
        %1262 = vmatpush1.msra.mxu0 %v501
        %1263 = vmatprep.subr.mxu0 %v506
        %1264 = vmatpush1.msra.mxu0 %v505
        %1265 = vmatprep.subr.mxu0 %v510
        %1266 = vmatpush1.msra.mxu0 %v509
        %1267 = vmatprep.subr.mxu0 %v514
        %1268 = vmatpush1.msra.mxu0 %v513
        %1269 = vmatprep.subr.mxu0 %v518
        %1270 = vmatpush1.msra.mxu0 %v517
        %1271 = vmatprep.subr.mxu0 %v522
        %1272 = vmatpush1.msra.mxu0 %v521
        %1273 = vmatprep.subr.mxu0 %v526
        %1274 = vmatpush1.msra.mxu0 %v525
        %1275 = vmatprep.subr.mxu0 %v530
        %1276 = vmatpush1.msra.mxu0 %v529
        %1277 = vmatprep.subr.mxu0 %v534
        %1278 = vmatpush1.msra.mxu0 %v533
        %1279 = vmatprep.mubr.f32.mxu0 %v923
        %1280 = vmatmul.mubr.f32.gmra.mrb[0].mxu0 %v403
        %v1281 = vpop.f32.mrb[0].mxu0
        %v1282 = vadd.f32 0.0, %v1281
        %v1283 = vpop.f32.mrb[0].mxu0
        %v1284 = vadd.f32 0.0, %v1283
        %1285 = vdwg.mxu0
        %1286 = vmatprep.subr.mxu0 %v538
        %1287 = vmatpush1.msra.mxu0 %v537
        %1288 = vmatprep.subr.mxu0 %v542
        %1289 = vmatpush1.msra.mxu0 %v541
        %1290 = vmatprep.subr.mxu0 %v546
        %1291 = vmatpush1.msra.mxu0 %v545
        %1292 = vmatprep.subr.mxu0 %v550
        %1293 = vmatpush1.msra.mxu0 %v549
        %1294 = vmatprep.subr.mxu0 %v554
        %1295 = vmatpush1.msra.mxu0 %v553
        %1296 = vmatprep.subr.mxu0 %v558
        %1297 = vmatpush1.msra.mxu0 %v557
        %1298 = vmatprep.subr.mxu0 %v562
        %1299 = vmatpush1.msra.mxu0 %v561
        %1300 = vmatprep.subr.mxu0 %v566
        %1301 = vmatpush1.msra.mxu0 %v565
        %1302 = vmatprep.subr.mxu0 %v570
        %1303 = vmatpush1.msra.mxu0 %v569
        %1304 = vmatprep.subr.mxu0 %v574
        %1305 = vmatpush1.msra.mxu0 %v573
        %1306 = vmatprep.subr.mxu0 %v578
        %1307 = vmatpush1.msra.mxu0 %v577
        %1308 = vmatprep.subr.mxu0 %v582
        %1309 = vmatpush1.msra.mxu0 %v581
        %1310 = vmatprep.subr.mxu0 %v586
        %1311 = vmatpush1.msra.mxu0 %v585
        %1312 = vmatprep.subr.mxu0 %v590
        %1313 = vmatpush1.msra.mxu0 %v589
        %1314 = vmatprep.subr.mxu0 %v594
        %1315 = vmatpush1.msra.mxu0 %v593
        %1316 = vmatprep.subr.mxu0 %v598
        %1317 = vmatpush1.msra.mxu0 %v597
        %1318 = vmatprep.subr.mxu0 %v602
        %1319 = vmatpush1.msra.mxu0 %v601
        %1320 = vmatprep.subr.mxu0 %v606
        %1321 = vmatpush1.msra.mxu0 %v605
        %1322 = vmatprep.subr.mxu0 %v610
        %1323 = vmatpush1.msra.mxu0 %v609
        %1324 = vmatprep.subr.mxu0 %v614
        %1325 = vmatpush1.msra.mxu0 %v613
        %1326 = vmatprep.subr.mxu0 %v618
        %1327 = vmatpush1.msra.mxu0 %v617
        %1328 = vmatprep.subr.mxu0 %v622
        %1329 = vmatpush1.msra.mxu0 %v621
        %1330 = vmatprep.subr.mxu0 %v626
        %1331 = vmatpush1.msra.mxu0 %v625
        %1332 = vmatprep.subr.mxu0 %v630
        %1333 = vmatpush1.msra.mxu0 %v629
        %1334 = vmatprep.subr.mxu0 %v634
        %1335 = vmatpush1.msra.mxu0 %v633
        %1336 = vmatprep.subr.mxu0 %v638
        %1337 = vmatpush1.msra.mxu0 %v637
        %1338 = vmatprep.subr.mxu0 %v642
        %1339 = vmatpush1.msra.mxu0 %v641
        %1340 = vmatprep.subr.mxu0 %v646
        %1341 = vmatpush1.msra.mxu0 %v645
        %1342 = vmatprep.subr.mxu0 %v650
        %1343 = vmatpush1.msra.mxu0 %v649
        %1344 = vmatprep.subr.mxu0 %v654
        %1345 = vmatpush1.msra.mxu0 %v653
        %1346 = vmatprep.subr.mxu0 %v658
        %1347 = vmatpush1.msra.mxu0 %v657
        %1348 = vmatprep.subr.mxu0 %v662
        %1349 = vmatpush1.msra.mxu0 %v661
        %1350 = vmatprep.mubr.f32.mxu0 %v924
        %1351 = vmatmul.mubr.f32.gmra.mrb[0].mxu0 %v404
        %v1352 = vpop.f32.mrb[0].mxu0
        %v1353 = vadd.f32 %v1282, %v1352
        %v1354 = vpop.f32.mrb[0].mxu0
        %v1355 = vadd.f32 %v1284, %v1354
        %1356 = vdwg.mxu0
        %1357 = vmatprep.subr.mxu0 %v666
        %1358 = vmatpush1.msra.mxu0 %v665
        %1359 = vmatprep.subr.mxu0 %v670
        %1360 = vmatpush1.msra.mxu0 %v669
        %1361 = vmatprep.subr.mxu0 %v674
        %1362 = vmatpush1.msra.mxu0 %v673
        %1363 = vmatprep.subr.mxu0 %v678
        %1364 = vmatpush1.msra.mxu0 %v677
        %1365 = vmatprep.subr.mxu0 %v682
        %1366 = vmatpush1.msra.mxu0 %v681
        %1367 = vmatprep.subr.mxu0 %v686
        %1368 = vmatpush1.msra.mxu0 %v685
        %1369 = vmatprep.subr.mxu0 %v690
        %1370 = vmatpush1.msra.mxu0 %v689
        %1371 = vmatprep.subr.mxu0 %v694
        %1372 = vmatpush1.msra.mxu0 %v693
        %1373 = vmatprep.subr.mxu0 %v698
        %1374 = vmatpush1.msra.mxu0 %v697
        %1375 = vmatprep.subr.mxu0 %v702
        %1376 = vmatpush1.msra.mxu0 %v701
        %1377 = vmatprep.subr.mxu0 %v706
        %1378 = vmatpush1.msra.mxu0 %v705
        %1379 = vmatprep.subr.mxu0 %v710
        %1380 = vmatpush1.msra.mxu0 %v709
        %1381 = vmatprep.subr.mxu0 %v714
        %1382 = vmatpush1.msra.mxu0 %v713
        %1383 = vmatprep.subr.mxu0 %v718
        %1384 = vmatpush1.msra.mxu0 %v717
        %1385 = vmatprep.subr.mxu0 %v722
        %1386 = vmatpush1.msra.mxu0 %v721
        %1387 = vmatprep.subr.mxu0 %v726
        %1388 = vmatpush1.msra.mxu0 %v725
        %1389 = vmatprep.subr.mxu0 %v730
        %1390 = vmatpush1.msra.mxu0 %v729
        %1391 = vmatprep.subr.mxu0 %v734
        %1392 = vmatpush1.msra.mxu0 %v733
        %1393 = vmatprep.subr.mxu0 %v738
        %1394 = vmatpush1.msra.mxu0 %v737
        %1395 = vmatprep.subr.mxu0 %v742
        %1396 = vmatpush1.msra.mxu0 %v741
        %1397 = vmatprep.subr.mxu0 %v746
        %1398 = vmatpush1.msra.mxu0 %v745
        %1399 = vmatprep.subr.mxu0 %v750
        %1400 = vmatpush1.msra.mxu0 %v749
        %1401 = vmatprep.subr.mxu0 %v754
        %1402 = vmatpush1.msra.mxu0 %v753
        %1403 = vmatprep.subr.mxu0 %v758
        %1404 = vmatpush1.msra.mxu0 %v757
        %1405 = vmatprep.subr.mxu0 %v762
        %1406 = vmatpush1.msra.mxu0 %v761
        %1407 = vmatprep.subr.mxu0 %v766
        %1408 = vmatpush1.msra.mxu0 %v765
        %1409 = vmatprep.subr.mxu0 %v770
        %1410 = vmatpush1.msra.mxu0 %v769
        %1411 = vmatprep.subr.mxu0 %v774
        %1412 = vmatpush1.msra.mxu0 %v773
        %1413 = vmatprep.subr.mxu0 %v778
        %1414 = vmatpush1.msra.mxu0 %v777
        %1415 = vmatprep.subr.mxu0 %v782
        %1416 = vmatpush1.msra.mxu0 %v781
        %1417 = vmatprep.subr.mxu0 %v786
        %1418 = vmatpush1.msra.mxu0 %v785
        %1419 = vmatprep.subr.mxu0 %v790
        %1420 = vmatpush1.msra.mxu0 %v789
        %1421 = vmatprep.mubr.f32.mxu0 %v925
        %1422 = vmatmul.mubr.f32.gmra.mrb[0].mxu0 %v405
        %v1423 = vpop.f32.mrb[0].mxu0
        %v1424 = vadd.f32 %v1353, %v1423
        %v1425 = vpop.f32.mrb[0].mxu0
        %v1426 = vadd.f32 %v1355, %v1425
        %1427 = vdwg.mxu0
        %1428 = vmatprep.subr.mxu0 %v794
        %1429 = vmatpush1.msra.mxu0 %v793
        %1430 = vmatprep.subr.mxu0 %v798
        %1431 = vmatpush1.msra.mxu0 %v797
        %1432 = vmatprep.subr.mxu0 %v802
        %1433 = vmatpush1.msra.mxu0 %v801
        %1434 = vmatprep.subr.mxu0 %v806
        %1435 = vmatpush1.msra.mxu0 %v805
        %1436 = vmatprep.subr.mxu0 %v810
        %1437 = vmatpush1.msra.mxu0 %v809
        %1438 = vmatprep.subr.mxu0 %v814
        %1439 = vmatpush1.msra.mxu0 %v813
        %1440 = vmatprep.subr.mxu0 %v818
        %1441 = vmatpush1.msra.mxu0 %v817
        %1442 = vmatprep.subr.mxu0 %v822
        %1443 = vmatpush1.msra.mxu0 %v821
        %1444 = vmatprep.subr.mxu0 %v826
        %1445 = vmatpush1.msra.mxu0 %v825
        %1446 = vmatprep.subr.mxu0 %v830
        %1447 = vmatpush1.msra.mxu0 %v829
        %1448 = vmatprep.subr.mxu0 %v834
        %1449 = vmatpush1.msra.mxu0 %v833
        %1450 = vmatprep.subr.mxu0 %v838
        %1451 = vmatpush1.msra.mxu0 %v837
        %1452 = vmatprep.subr.mxu0 %v842
        %1453 = vmatpush1.msra.mxu0 %v841
        %1454 = vmatprep.subr.mxu0 %v846
        %1455 = vmatpush1.msra.mxu0 %v845
        %1456 = vmatprep.subr.mxu0 %v850
        %1457 = vmatpush1.msra.mxu0 %v849
        %1458 = vmatprep.subr.mxu0 %v854
        %1459 = vmatpush1.msra.mxu0 %v853
        %1460 = vmatprep.subr.mxu0 %v858
        %1461 = vmatpush1.msra.mxu0 %v857
        %1462 = vmatprep.subr.mxu0 %v862
        %1463 = vmatpush1.msra.mxu0 %v861
        %1464 = vmatprep.subr.mxu0 %v866
        %1465 = vmatpush1.msra.mxu0 %v865
        %1466 = vmatprep.subr.mxu0 %v870
        %1467 = vmatpush1.msra.mxu0 %v869
        %1468 = vmatprep.subr.mxu0 %v874
        %1469 = vmatpush1.msra.mxu0 %v873
        %1470 = vmatprep.subr.mxu0 %v878
        %1471 = vmatpush1.msra.mxu0 %v877
        %1472 = vmatprep.subr.mxu0 %v882
        %1473 = vmatpush1.msra.mxu0 %v881
        %1474 = vmatprep.subr.mxu0 %v886
        %1475 = vmatpush1.msra.mxu0 %v885
        %1476 = vmatprep.subr.mxu0 %v890
        %1477 = vmatpush1.msra.mxu0 %v889
        %1478 = vmatprep.subr.mxu0 %v894
        %1479 = vmatpush1.msra.mxu0 %v893
        %1480 = vmatprep.subr.mxu0 %v898
        %1481 = vmatpush1.msra.mxu0 %v897
        %1482 = vmatprep.subr.mxu0 %v902
        %1483 = vmatpush1.msra.mxu0 %v901
        %1484 = vmatprep.subr.mxu0 %v906
        %1485 = vmatpush1.msra.mxu0 %v905
        %1486 = vmatprep.subr.mxu0 %v910
        %1487 = vmatpush1.msra.mxu0 %v909
        %1488 = vmatprep.subr.mxu0 %v914
        %1489 = vmatpush1.msra.mxu0 %v913
        %1490 = vmatprep.subr.mxu0 %v918
        %1491 = vmatpush1.msra.mxu0 %v917
        %1492 = vmatprep.mubr.f32.mxu0 %v926
        %1493 = vmatmul.mubr.f32.gmra.mrb[0].mxu0 %v406
        %v1494 = vpop.f32.mrb[0].mxu0
        %v1495 = vadd.f32 %v1424, %v1494
        %v1496 = vpop.f32.mrb[0].mxu0
        %v1497 = vadd.f32 %v1426, %v1496
        %1498 = vdwg.mxu0
        %v1503 = vcombine.low %v1211, %v1213
        %v1504 = vcombine.low %v1495, %v1497
        %v1507 = vadd.f32 %v401, %v1503
        %v1508 = vadd.f32 %v402, %v1504
        %1509 = vst [vmem:[#allocation2] sm:$0xff] %v1507
        %1510 = vst [vmem:[#allocation2 + $0x8] sm:$0xff] %v1508
        %p1511 = scmp.eq.s32.totalorder %s32, 5
        // Predicated region
        $region73: #{tpu_custom_call.1} parent=47 // pred_check
          %p1512 = pneg %p1511
        $region74: #{tpu_custom_call.1} parent=47 // pred_check_branch
          %1514 = sbr.rel (%p1512) target = $region76
        $region75: #{tpu_custom_call.1} parent=47 // pred_region
          %v1515 = vld [vmem:[#allocation2] sm:$0xff]
          %v1516 = vld [vmem:[#allocation2 + $0x8] sm:$0xff]
          %v1517 = vld [vmem:[#allocation8] sm:$0xf]
          %v1519 = vlaneseq
          %v1520 = vshrl.u32 %v1519, 7
          %v1521 = vsub.s32 0, %v1520
          %v1522 = vrot.slane %v1517, %v1521
          %v1523 = vlaneseq
          %v1524 = vshrl.u32 %v1523, 7
          %v1525 = vsub.s32 1, %v1524
          %v1526 = vrot.slane %v1517, %v1525
          %v1527 = vlaneseq
          %v1528 = vshrl.u32 %v1527, 7
          %v1529 = vsub.s32 2, %v1528
          %v1530 = vrot.slane %v1517, %v1529
          %v1531 = vlaneseq
          %v1532 = vshrl.u32 %v1531, 7
          %v1533 = vsub.s32 3, %v1532
          %v1534 = vrot.slane %v1517, %v1533
          %v1535 = vcombine.low %v1522, %v1526
          %v1536 = vcombine.low %v1530, %v1534
          %v1539 = vadd.f32 %v1515, %v1535
          %v1540 = vadd.f32 %v1516, %v1536
          %v1541 = vmax.f32 %v1539, 0.0
          %v1542 = vmax.f32 %v1540, 0.0
          %v1543 = vld [vmem:[#allocation9] sm:$0xff]
          %v1544 = vld [vmem:[#allocation9 + $0x8] sm:$0xff]
          %v1545 = vld [vmem:[#allocation9 + $0x10] sm:$0xff]
          %v1546 = vld [vmem:[#allocation9 + $0x18] sm:$0xff]
          %v1547 = vld [vmem:[#allocation9 + $0x20] sm:$0xff]
          %v1548 = vld [vmem:[#allocation9 + $0x28] sm:$0xff]
          %v1549 = vld [vmem:[#allocation9 + $0x30] sm:$0xff]
          %v1550 = vld [vmem:[#allocation9 + $0x38] sm:$0xff]
          %v1551 = vld [vmem:[#allocation9 + $0x40] sm:$0xff]
          %v1552 = vld [vmem:[#allocation9 + $0x48] sm:$0xff]
          %v1553 = vld [vmem:[#allocation9 + $0x50] sm:$0xff]
          %v1554 = vld [vmem:[#allocation9 + $0x58] sm:$0xff]
          %v1555 = vld [vmem:[#allocation9 + $0x60] sm:$0xff]
          %v1556 = vld [vmem:[#allocation9 + $0x68] sm:$0xff]
          %v1557 = vld [vmem:[#allocation9 + $0x70] sm:$0xff]
          %v1558 = vld [vmem:[#allocation9 + $0x78] sm:$0xff]
          %v1559 = vld [vmem:[#allocation9 + $0x80] sm:$0xff]
          %v1560 = vld [vmem:[#allocation9 + $0x88] sm:$0xff]
          %v1561 = vld [vmem:[#allocation9 + $0x90] sm:$0xff]
          %v1562 = vld [vmem:[#allocation9 + $0x98] sm:$0xff]
          %v1563 = vld [vmem:[#allocation9 + $0xa0] sm:$0xff]
          %v1564 = vld [vmem:[#allocation9 + $0xa8] sm:$0xff]
          %v1565 = vld [vmem:[#allocation9 + $0xb0] sm:$0xff]
          %v1566 = vld [vmem:[#allocation9 + $0xb8] sm:$0xff]
          %v1567 = vld [vmem:[#allocation9 + $0xc0] sm:$0xff]
          %v1568 = vld [vmem:[#allocation9 + $0xc8] sm:$0xff]
          %v1569 = vld [vmem:[#allocation9 + $0xd0] sm:$0xff]
          %v1570 = vld [vmem:[#allocation9 + $0xd8] sm:$0xff]
          %v1571 = vld [vmem:[#allocation9 + $0xe0] sm:$0xff]
          %v1572 = vld [vmem:[#allocation9 + $0xe8] sm:$0xff]
          %v1573 = vld [vmem:[#allocation9 + $0xf0] sm:$0xff]
          %v1574 = vld [vmem:[#allocation9 + $0xf8] sm:$0xff]
          %v1575 = vld [vmem:[#allocation9 + $0x100] sm:$0xff]
          %v1576 = vld [vmem:[#allocation9 + $0x108] sm:$0xff]
          %v1577 = vld [vmem:[#allocation9 + $0x110] sm:$0xff]
          %v1578 = vld [vmem:[#allocation9 + $0x118] sm:$0xff]
          %v1579 = vld [vmem:[#allocation9 + $0x120] sm:$0xff]
          %v1580 = vld [vmem:[#allocation9 + $0x128] sm:$0xff]
          %v1581 = vld [vmem:[#allocation9 + $0x130] sm:$0xff]
          %v1582 = vld [vmem:[#allocation9 + $0x138] sm:$0xff]
          %v1583 = vld [vmem:[#allocation9 + $0x140] sm:$0xff]
          %v1584 = vld [vmem:[#allocation9 + $0x148] sm:$0xff]
          %v1585 = vld [vmem:[#allocation9 + $0x150] sm:$0xff]
          %v1586 = vld [vmem:[#allocation9 + $0x158] sm:$0xff]
          %v1587 = vld [vmem:[#allocation9 + $0x160] sm:$0xff]
          %v1588 = vld [vmem:[#allocation9 + $0x168] sm:$0xff]
          %v1589 = vld [vmem:[#allocation9 + $0x170] sm:$0xff]
          %v1590 = vld [vmem:[#allocation9 + $0x178] sm:$0xff]
          %v1591 = vld [vmem:[#allocation9 + $0x180] sm:$0xff]
          %v1592 = vld [vmem:[#allocation9 + $0x188] sm:$0xff]
          %v1593 = vld [vmem:[#allocation9 + $0x190] sm:$0xff]
          %v1594 = vld [vmem:[#allocation9 + $0x198] sm:$0xff]
          %v1595 = vld [vmem:[#allocation9 + $0x1a0] sm:$0xff]
          %v1596 = vld [vmem:[#allocation9 + $0x1a8] sm:$0xff]
          %v1597 = vld [vmem:[#allocation9 + $0x1b0] sm:$0xff]
          %v1598 = vld [vmem:[#allocation9 + $0x1b8] sm:$0xff]
          %v1599 = vld [vmem:[#allocation9 + $0x1c0] sm:$0xff]
          %v1600 = vld [vmem:[#allocation9 + $0x1c8] sm:$0xff]
          %v1601 = vld [vmem:[#allocation9 + $0x1d0] sm:$0xff]
          %v1602 = vld [vmem:[#allocation9 + $0x1d8] sm:$0xff]
          %v1603 = vld [vmem:[#allocation9 + $0x1e0] sm:$0xff]
          %v1604 = vld [vmem:[#allocation9 + $0x1e8] sm:$0xff]
          %v1605 = vld [vmem:[#allocation9 + $0x1f0] sm:$0xff]
          %v1606 = vld [vmem:[#allocation9 + $0x1f8] sm:$0xff]
          %v1607 = vld [vmem:[#allocation9 + $0x200] sm:$0xff]
          %v1608 = vld [vmem:[#allocation9 + $0x208] sm:$0xff]
          %v1609 = vld [vmem:[#allocation9 + $0x210] sm:$0xff]
          %v1610 = vld [vmem:[#allocation9 + $0x218] sm:$0xff]
          %v1611 = vld [vmem:[#allocation9 + $0x220] sm:$0xff]
          %v1612 = vld [vmem:[#allocation9 + $0x228] sm:$0xff]
          %v1613 = vld [vmem:[#allocation9 + $0x230] sm:$0xff]
          %v1614 = vld [vmem:[#allocation9 + $0x238] sm:$0xff]
          %v1615 = vld [vmem:[#allocation9 + $0x240] sm:$0xff]
          %v1616 = vld [vmem:[#allocation9 + $0x248] sm:$0xff]
          %v1617 = vld [vmem:[#allocation9 + $0x250] sm:$0xff]
          %v1618 = vld [vmem:[#allocation9 + $0x258] sm:$0xff]
          %v1619 = vld [vmem:[#allocation9 + $0x260] sm:$0xff]
          %v1620 = vld [vmem:[#allocation9 + $0x268] sm:$0xff]
          %v1621 = vld [vmem:[#allocation9 + $0x270] sm:$0xff]
          %v1622 = vld [vmem:[#allocation9 + $0x278] sm:$0xff]
          %v1623 = vld [vmem:[#allocation9 + $0x280] sm:$0xff]
          %v1624 = vld [vmem:[#allocation9 + $0x288] sm:$0xff]
          %v1625 = vld [vmem:[#allocation9 + $0x290] sm:$0xff]
          %v1626 = vld [vmem:[#allocation9 + $0x298] sm:$0xff]
          %v1627 = vld [vmem:[#allocation9 + $0x2a0] sm:$0xff]
          %v1628 = vld [vmem:[#allocation9 + $0x2a8] sm:$0xff]
          %v1629 = vld [vmem:[#allocation9 + $0x2b0] sm:$0xff]
          %v1630 = vld [vmem:[#allocation9 + $0x2b8] sm:$0xff]
          %v1631 = vld [vmem:[#allocation9 + $0x2c0] sm:$0xff]
          %v1632 = vld [vmem:[#allocation9 + $0x2c8] sm:$0xff]
          %v1633 = vld [vmem:[#allocation9 + $0x2d0] sm:$0xff]
          %v1634 = vld [vmem:[#allocation9 + $0x2d8] sm:$0xff]
          %v1635 = vld [vmem:[#allocation9 + $0x2e0] sm:$0xff]
          %v1636 = vld [vmem:[#allocation9 + $0x2e8] sm:$0xff]
          %v1637 = vld [vmem:[#allocation9 + $0x2f0] sm:$0xff]
          %v1638 = vld [vmem:[#allocation9 + $0x2f8] sm:$0xff]
          %v1639 = vld [vmem:[#allocation9 + $0x300] sm:$0xff]
          %v1640 = vld [vmem:[#allocation9 + $0x308] sm:$0xff]
          %v1641 = vld [vmem:[#allocation9 + $0x310] sm:$0xff]
          %v1642 = vld [vmem:[#allocation9 + $0x318] sm:$0xff]
          %v1643 = vld [vmem:[#allocation9 + $0x320] sm:$0xff]
          %v1644 = vld [vmem:[#allocation9 + $0x328] sm:$0xff]
          %v1645 = vld [vmem:[#allocation9 + $0x330] sm:$0xff]
          %v1646 = vld [vmem:[#allocation9 + $0x338] sm:$0xff]
          %v1647 = vld [vmem:[#allocation9 + $0x340] sm:$0xff]
          %v1648 = vld [vmem:[#allocation9 + $0x348] sm:$0xff]
          %v1649 = vld [vmem:[#allocation9 + $0x350] sm:$0xff]
          %v1650 = vld [vmem:[#allocation9 + $0x358] sm:$0xff]
          %v1651 = vld [vmem:[#allocation9 + $0x360] sm:$0xff]
          %v1652 = vld [vmem:[#allocation9 + $0x368] sm:$0xff]
          %v1653 = vld [vmem:[#allocation9 + $0x370] sm:$0xff]
          %v1654 = vld [vmem:[#allocation9 + $0x378] sm:$0xff]
          %v1655 = vld [vmem:[#allocation9 + $0x380] sm:$0xff]
          %v1656 = vld [vmem:[#allocation9 + $0x388] sm:$0xff]
          %v1657 = vld [vmem:[#allocation9 + $0x390] sm:$0xff]
          %v1658 = vld [vmem:[#allocation9 + $0x398] sm:$0xff]
          %v1659 = vld [vmem:[#allocation9 + $0x3a0] sm:$0xff]
          %v1660 = vld [vmem:[#allocation9 + $0x3a8] sm:$0xff]
          %v1661 = vld [vmem:[#allocation9 + $0x3b0] sm:$0xff]
          %v1662 = vld [vmem:[#allocation9 + $0x3b8] sm:$0xff]
          %v1663 = vld [vmem:[#allocation9 + $0x3c0] sm:$0xff]
          %v1664 = vld [vmem:[#allocation9 + $0x3c8] sm:$0xff]
          %v1665 = vld [vmem:[#allocation9 + $0x3d0] sm:$0xff]
          %v1666 = vld [vmem:[#allocation9 + $0x3d8] sm:$0xff]
          %v1667 = vld [vmem:[#allocation9 + $0x3e0] sm:$0xff]
          %v1668 = vld [vmem:[#allocation9 + $0x3e8] sm:$0xff]
          %v1669 = vld [vmem:[#allocation9 + $0x3f0] sm:$0xff]
          %v1670 = vld [vmem:[#allocation9 + $0x3f8] sm:$0xff]
          %v1671 = vld [vmem:[#allocation11] sm:$0x3]
          %v1673 = vlaneseq
          %v1674 = vshrl.u32 %v1673, 7
          %v1675 = vsub.s32 0, %v1674
          %v1676 = vrot.slane %v1671, %v1675
          %v1677 = vlaneseq
          %v1678 = vshrl.u32 %v1677, 7
          %v1679 = vsub.s32 1, %v1678
          %v1680 = vrot.slane %v1671, %v1679
          %v1685 = vcombine.high %v1541, %v1541
          %v1686 = vcombine.high %v1542, %v1542
          %1689 = vmatprep.subr.mxu0 %v1544
          %1690 = vmatpush1.msra.mxu0 %v1543
          %1691 = vmatprep.subr.mxu0 %v1546
          %1692 = vmatpush1.msra.mxu0 %v1545
          %1693 = vmatprep.subr.mxu0 %v1548
          %1694 = vmatpush1.msra.mxu0 %v1547
          %1695 = vmatprep.subr.mxu0 %v1550
          %1696 = vmatpush1.msra.mxu0 %v1549
          %1697 = vmatprep.subr.mxu0 %v1552
          %1698 = vmatpush1.msra.mxu0 %v1551
          %1699 = vmatprep.subr.mxu0 %v1554
          %1700 = vmatpush1.msra.mxu0 %v1553
          %1701 = vmatprep.subr.mxu0 %v1556
          %1702 = vmatpush1.msra.mxu0 %v1555
          %1703 = vmatprep.subr.mxu0 %v1558
          %1704 = vmatpush1.msra.mxu0 %v1557
          %1705 = vmatprep.subr.mxu0 %v1560
          %1706 = vmatpush1.msra.mxu0 %v1559
          %1707 = vmatprep.subr.mxu0 %v1562
          %1708 = vmatpush1.msra.mxu0 %v1561
          %1709 = vmatprep.subr.mxu0 %v1564
          %1710 = vmatpush1.msra.mxu0 %v1563
          %1711 = vmatprep.subr.mxu0 %v1566
          %1712 = vmatpush1.msra.mxu0 %v1565
          %1713 = vmatprep.subr.mxu0 %v1568
          %1714 = vmatpush1.msra.mxu0 %v1567
          %1715 = vmatprep.subr.mxu0 %v1570
          %1716 = vmatpush1.msra.mxu0 %v1569
          %1717 = vmatprep.subr.mxu0 %v1572
          %1718 = vmatpush1.msra.mxu0 %v1571
          %1719 = vmatprep.subr.mxu0 %v1574
          %1720 = vmatpush1.msra.mxu0 %v1573
          %1721 = vmatprep.subr.mxu0 %v1576
          %1722 = vmatpush1.msra.mxu0 %v1575
          %1723 = vmatprep.subr.mxu0 %v1578
          %1724 = vmatpush1.msra.mxu0 %v1577
          %1725 = vmatprep.subr.mxu0 %v1580
          %1726 = vmatpush1.msra.mxu0 %v1579
          %1727 = vmatprep.subr.mxu0 %v1582
          %1728 = vmatpush1.msra.mxu0 %v1581
          %1729 = vmatprep.subr.mxu0 %v1584
          %1730 = vmatpush1.msra.mxu0 %v1583
          %1731 = vmatprep.subr.mxu0 %v1586
          %1732 = vmatpush1.msra.mxu0 %v1585
          %1733 = vmatprep.subr.mxu0 %v1588
          %1734 = vmatpush1.msra.mxu0 %v1587
          %1735 = vmatprep.subr.mxu0 %v1590
          %1736 = vmatpush1.msra.mxu0 %v1589
          %1737 = vmatprep.subr.mxu0 %v1592
          %1738 = vmatpush1.msra.mxu0 %v1591
          %1739 = vmatprep.subr.mxu0 %v1594
          %1740 = vmatpush1.msra.mxu0 %v1593
          %1741 = vmatprep.subr.mxu0 %v1596
          %1742 = vmatpush1.msra.mxu0 %v1595
          %1743 = vmatprep.subr.mxu0 %v1598
          %1744 = vmatpush1.msra.mxu0 %v1597
          %1745 = vmatprep.subr.mxu0 %v1600
          %1746 = vmatpush1.msra.mxu0 %v1599
          %1747 = vmatprep.subr.mxu0 %v1602
          %1748 = vmatpush1.msra.mxu0 %v1601
          %1749 = vmatprep.subr.mxu0 %v1604
          %1750 = vmatpush1.msra.mxu0 %v1603
          %1751 = vmatprep.subr.mxu0 %v1606
          %1752 = vmatpush1.msra.mxu0 %v1605
          %1753 = vmatprep.mubr.f32.mxu0 %v1685
          %1754 = vmatmul.mubr.f32.gmra.mrb[0].mxu0 %v1541
          %v1755 = vpop.f32.mrb[0].mxu0
          %v1756 = vadd.f32 %v1676, %v1755
          %v1757 = vpop.f32.mrb[0].mxu0
          %v1758 = vadd.f32 %v1680, %v1757
          %1759 = vdwg.mxu0
          %1760 = vmatprep.subr.mxu0 %v1608
          %1761 = vmatpush1.msra.mxu0 %v1607
          %1762 = vmatprep.subr.mxu0 %v1610
          %1763 = vmatpush1.msra.mxu0 %v1609
          %1764 = vmatprep.subr.mxu0 %v1612
          %1765 = vmatpush1.msra.mxu0 %v1611
          %1766 = vmatprep.subr.mxu0 %v1614
          %1767 = vmatpush1.msra.mxu0 %v1613
          %1768 = vmatprep.subr.mxu0 %v1616
          %1769 = vmatpush1.msra.mxu0 %v1615
          %1770 = vmatprep.subr.mxu0 %v1618
          %1771 = vmatpush1.msra.mxu0 %v1617
          %1772 = vmatprep.subr.mxu0 %v1620
          %1773 = vmatpush1.msra.mxu0 %v1619
          %1774 = vmatprep.subr.mxu0 %v1622
          %1775 = vmatpush1.msra.mxu0 %v1621
          %1776 = vmatprep.subr.mxu0 %v1624
          %1777 = vmatpush1.msra.mxu0 %v1623
          %1778 = vmatprep.subr.mxu0 %v1626
          %1779 = vmatpush1.msra.mxu0 %v1625
          %1780 = vmatprep.subr.mxu0 %v1628
          %1781 = vmatpush1.msra.mxu0 %v1627
          %1782 = vmatprep.subr.mxu0 %v1630
          %1783 = vmatpush1.msra.mxu0 %v1629
          %1784 = vmatprep.subr.mxu0 %v1632
          %1785 = vmatpush1.msra.mxu0 %v1631
          %1786 = vmatprep.subr.mxu0 %v1634
          %1787 = vmatpush1.msra.mxu0 %v1633
          %1788 = vmatprep.subr.mxu0 %v1636
          %1789 = vmatpush1.msra.mxu0 %v1635
          %1790 = vmatprep.subr.mxu0 %v1638
          %1791 = vmatpush1.msra.mxu0 %v1637
          %1792 = vmatprep.subr.mxu0 %v1640
          %1793 = vmatpush1.msra.mxu0 %v1639
          %1794 = vmatprep.subr.mxu0 %v1642
          %1795 = vmatpush1.msra.mxu0 %v1641
          %1796 = vmatprep.subr.mxu0 %v1644
          %1797 = vmatpush1.msra.mxu0 %v1643
          %1798 = vmatprep.subr.mxu0 %v1646
          %1799 = vmatpush1.msra.mxu0 %v1645
          %1800 = vmatprep.subr.mxu0 %v1648
          %1801 = vmatpush1.msra.mxu0 %v1647
          %1802 = vmatprep.subr.mxu0 %v1650
          %1803 = vmatpush1.msra.mxu0 %v1649
          %1804 = vmatprep.subr.mxu0 %v1652
          %1805 = vmatpush1.msra.mxu0 %v1651
          %1806 = vmatprep.subr.mxu0 %v1654
          %1807 = vmatpush1.msra.mxu0 %v1653
          %1808 = vmatprep.subr.mxu0 %v1656
          %1809 = vmatpush1.msra.mxu0 %v1655
          %1810 = vmatprep.subr.mxu0 %v1658
          %1811 = vmatpush1.msra.mxu0 %v1657
          %1812 = vmatprep.subr.mxu0 %v1660
          %1813 = vmatpush1.msra.mxu0 %v1659
          %1814 = vmatprep.subr.mxu0 %v1662
          %1815 = vmatpush1.msra.mxu0 %v1661
          %1816 = vmatprep.subr.mxu0 %v1664
          %1817 = vmatpush1.msra.mxu0 %v1663
          %1818 = vmatprep.subr.mxu0 %v1666
          %1819 = vmatpush1.msra.mxu0 %v1665
          %1820 = vmatprep.subr.mxu0 %v1668
          %1821 = vmatpush1.msra.mxu0 %v1667
          %1822 = vmatprep.subr.mxu0 %v1670
          %1823 = vmatpush1.msra.mxu0 %v1669
          %1824 = vmatprep.mubr.f32.mxu0 %v1686
          %1825 = vmatmul.mubr.f32.gmra.mrb[0].mxu0 %v1542
          %v1826 = vpop.f32.mrb[0].mxu0
          %v1827 = vadd.f32 %v1756, %v1826
          %v1828 = vpop.f32.mrb[0].mxu0
          %v1829 = vadd.f32 %v1758, %v1828
          %1830 = vdwg.mxu0
          %v1831 = vmax.f32 %v1827, 0.0
          %v1832 = vmax.f32 %v1829, 0.0
          %v1833 = vld [vmem:[%s5] sm:$0xff]
          %v1834 = vld [vmem:[%s5 + $0x8] sm:$0xff]
          %v1835 = vld [vmem:[%s5 + $0x10] sm:$0xff]
          %v1836 = vld [vmem:[%s5 + $0x18] sm:$0xff]
          %v1837 = vld [vmem:[%s5 + $0x20] sm:$0xff]
          %v1838 = vld [vmem:[%s5 + $0x28] sm:$0xff]
          %v1839 = vld [vmem:[%s5 + $0x30] sm:$0xff]
          %v1840 = vld [vmem:[%s5 + $0x38] sm:$0xff]
          %v1841 = vld [vmem:[%s5 + $0x40] sm:$0xff]
          %v1842 = vld [vmem:[%s5 + $0x48] sm:$0xff]
          %v1843 = vld [vmem:[%s5 + $0x50] sm:$0xff]
          %v1844 = vld [vmem:[%s5 + $0x58] sm:$0xff]
          %v1845 = vld [vmem:[%s5 + $0x60] sm:$0xff]
          %v1846 = vld [vmem:[%s5 + $0x68] sm:$0xff]
          %v1847 = vld [vmem:[%s5 + $0x70] sm:$0xff]
          %v1848 = vld [vmem:[%s5 + $0x78] sm:$0xff]
          %v1849 = vld [vmem:[%s5 + $0x80] sm:$0xff]
          %v1850 = vld [vmem:[%s5 + $0x88] sm:$0xff]
          %v1851 = vld [vmem:[%s5 + $0x90] sm:$0xff]
          %v1852 = vld [vmem:[%s5 + $0x98] sm:$0xff]
          %v1853 = vld [vmem:[%s5 + $0xa0] sm:$0xff]
          %v1854 = vld [vmem:[%s5 + $0xa8] sm:$0xff]
          %v1855 = vld [vmem:[%s5 + $0xb0] sm:$0xff]
          %v1856 = vld [vmem:[%s5 + $0xb8] sm:$0xff]
          %v1857 = vld [vmem:[%s5 + $0xc0] sm:$0xff]
          %v1858 = vld [vmem:[%s5 + $0xc8] sm:$0xff]
          %v1859 = vld [vmem:[%s5 + $0xd0] sm:$0xff]
          %v1860 = vld [vmem:[%s5 + $0xd8] sm:$0xff]
          %v1861 = vld [vmem:[%s5 + $0xe0] sm:$0xff]
          %v1862 = vld [vmem:[%s5 + $0xe8] sm:$0xff]
          %v1863 = vld [vmem:[%s5 + $0xf0] sm:$0xff]
          %v1864 = vld [vmem:[%s5 + $0xf8] sm:$0xff]
          %v1865 = vld [vmem:[#allocation3] sm:$0x1]
          %v1867 = vlaneseq
          %v1868 = vshrl.u32 %v1867, 7
          %v1869 = vsub.s32 0, %v1868
          %v1870 = vrot.slane %v1865, %v1869
          %1872 = vmatprep.subr.mxu0 0.0
          %1873 = vmatpush1.msra.mxu0 %v1833
          %1874 = vmatprep.subr.mxu0 0.0
          %1875 = vmatpush1.msra.mxu0 %v1834
          %1876 = vmatprep.subr.mxu0 0.0
          %1877 = vmatpush1.msra.mxu0 %v1835
          %1878 = vmatprep.subr.mxu0 0.0
          %1879 = vmatpush1.msra.mxu0 %v1836
          %1880 = vmatprep.subr.mxu0 0.0
          %1881 = vmatpush1.msra.mxu0 %v1837
          %1882 = vmatprep.subr.mxu0 0.0
          %1883 = vmatpush1.msra.mxu0 %v1838
          %1884 = vmatprep.subr.mxu0 0.0
          %1885 = vmatpush1.msra.mxu0 %v1839
          %1886 = vmatprep.subr.mxu0 0.0
          %1887 = vmatpush1.msra.mxu0 %v1840
          %1888 = vmatprep.subr.mxu0 0.0
          %1889 = vmatpush1.msra.mxu0 %v1841
          %1890 = vmatprep.subr.mxu0 0.0
          %1891 = vmatpush1.msra.mxu0 %v1842
          %1892 = vmatprep.subr.mxu0 0.0
          %1893 = vmatpush1.msra.mxu0 %v1843
          %1894 = vmatprep.subr.mxu0 0.0
          %1895 = vmatpush1.msra.mxu0 %v1844
          %1896 = vmatprep.subr.mxu0 0.0
          %1897 = vmatpush1.msra.mxu0 %v1845
          %1898 = vmatprep.subr.mxu0 0.0
          %1899 = vmatpush1.msra.mxu0 %v1846
          %1900 = vmatprep.subr.mxu0 0.0
          %1901 = vmatpush1.msra.mxu0 %v1847
          %1902 = vmatprep.subr.mxu0 0.0
          %1903 = vmatpush1.msra.mxu0 %v1848
          %1904 = vmatprep.subr.mxu0 0.0
          %1905 = vmatpush1.msra.mxu0 %v1849
          %1906 = vmatprep.subr.mxu0 0.0
          %1907 = vmatpush1.msra.mxu0 %v1850
          %1908 = vmatprep.subr.mxu0 0.0
          %1909 = vmatpush1.msra.mxu0 %v1851
          %1910 = vmatprep.subr.mxu0 0.0
          %1911 = vmatpush1.msra.mxu0 %v1852
          %1912 = vmatprep.subr.mxu0 0.0
          %1913 = vmatpush1.msra.mxu0 %v1853
          %1914 = vmatprep.subr.mxu0 0.0
          %1915 = vmatpush1.msra.mxu0 %v1854
          %1916 = vmatprep.subr.mxu0 0.0
          %1917 = vmatpush1.msra.mxu0 %v1855
          %1918 = vmatprep.subr.mxu0 0.0
          %1919 = vmatpush1.msra.mxu0 %v1856
          %1920 = vmatprep.subr.mxu0 0.0
          %1921 = vmatpush1.msra.mxu0 %v1857
          %1922 = vmatprep.subr.mxu0 0.0
          %1923 = vmatpush1.msra.mxu0 %v1858
          %1924 = vmatprep.subr.mxu0 0.0
          %1925 = vmatpush1.msra.mxu0 %v1859
          %1926 = vmatprep.subr.mxu0 0.0
          %1927 = vmatpush1.msra.mxu0 %v1860
          %1928 = vmatprep.subr.mxu0 0.0
          %1929 = vmatpush1.msra.mxu0 %v1861
          %1930 = vmatprep.subr.mxu0 0.0
          %1931 = vmatpush1.msra.mxu0 %v1862
          %1932 = vmatprep.subr.mxu0 0.0
          %1933 = vmatpush1.msra.mxu0 %v1863
          %1934 = vmatprep.subr.mxu0 0.0
          %1935 = vmatpush1.msra.mxu0 %v1864
          %1936 = vmatprep.mubr.f32.mxu0 %v1832
          %1937 = vmatmul.mubr.f32.gmra.mrb[0].mxu0 %v1831
          %v1938 = vpop.f32.mrb[0].mxu0
          %v1939 = vadd.f32 %v1870, %v1938
          %v1940 = vpop.f32.mrb[0].mxu0
          %1941 = vdwg.mxu0
          %v1942 = vsub.f32 0.0, %v1939
          %v1943 = vmul.f32 %v1942, 1.442695
          %v1944 = vpow.pop %v1943
          %v1945 = vadd.f32 %v1944, 1.0
          %v1946 = vrcp.pop %v1945
          %v1947 = vmul.f32 1.0, %v1946
          %vm1948 = vcmask 3072
          %1949 = vst.msk [vmem:[%s394] sm:$0xf] %vm1948, %v1947
        $region76: #{tpu_custom_call.1} parent=47 // pred_fallthru
          _
        %p1950 = scmp.lt.s32.totalorder %s31, 0
        %s1951 = scalar_select %p1950, %s31, 0
        %s1952 = smul.addr %s1951, 4
        %s1953 = scalar_lea.vmem %s7, %s1952
        // Predicated region
        $region77: #{tpu_custom_call.1} parent=47 // pred_check
          %p1954 = pneg %p216
        $region78: #{tpu_custom_call.1} parent=47 // pred_check_branch
          %1956 = sbr.rel (%p1954) target = $region80
        $region79: #{tpu_custom_call.1} parent=47 // pred_region
          _
        $region80: #{tpu_custom_call.1} parent=47 // pred_fallthru
          _
        // Predicated region
        $region81: #{tpu_custom_call.1} parent=47 // pred_check
          %p1957 = pneg %p216
        $region82: #{tpu_custom_call.1} parent=47 // pred_check_branch
          %1959 = sbr.rel (%p1957) target = $region84
        $region83: #{tpu_custom_call.1} parent=47 // pred_region
          %p1960 = scmp.lt.s32.totalorder %s31, 0
          %s1961 = scalar_select %p1960, %s31, 0
          %s1962 = smul.addr %s1961, 4
          %s1963 = scalar_lea.vmem %s7, %s1962
        $region84: #{tpu_custom_call.1} parent=47 // pred_fallthru
          _
      $region48: #{tpu_custom_call.1} parent=5 // pred_fallthru
        _
      %p1964 = scmp.le.s32.totalorder 2, %s22
      // Predicated region
      $region85: #{tpu_custom_call.1} parent=5 // pred_check
        %p1965 = pneg %p1964
      $region86: #{tpu_custom_call.1} parent=5 // pred_check_branch
        %1967 = sbr.rel (%p1965) target = $region88
      $region87: #{tpu_custom_call.1} parent=5 // pred_region
        %s1968 = ssub.s32 %s22, 2
      $region88: #{tpu_custom_call.1} parent=5 // pred_fallthru
        _
    $region6: #{tpu_custom_call.1} parent=1 // loop_footer
      %s26 = sadd.s32 1, %s22
    $region7: #{tpu_custom_call.1} parent=1 // loop_footer_branch
      %21 = sbr.rel target = $region3
    $region8: #{tpu_custom_call.1} parent=1 // loop_exit
      _
    %1969 = vsyncpa [#allocation5], 1
    %s1970 = scalar_lea.sflag [#allocation5], 1
    %1971 = vsyncpa %s1970, 1
    %1972 = vsyncpa [#allocation7], 1
    %s1973 = scalar_lea.sflag [#allocation7], 1
    %1974 = vsyncpa %s1973, 1
    %1975 = vsyncpa [#allocation10], 1

</llo_original>
